<compile_context>
chip_gen: v6e
topology: v6e:2x2x1
jax: 0.10.0
libtpu: 0.0.40
codegen_flags: <defaults>
</compile_context>

<pallas_src>
import functools

import jax
import jax.numpy as jnp
from jax import lax
from jax.experimental import pallas as pl
from jax.experimental.pallas import tpu as pltpu


def _round_up(x, m):
    return (x + m - 1) // m * m


# --------------------------------------------------------------------------------------
# Kernel: recurrent BiLSTM (interleaved fwd/bwd chains, time-chunked) + FC + sigmoid
# --------------------------------------------------------------------------------------
def bilstm_classifier_kernel(len_ref, xpf_ref, xpb_ref,
                             whh_f_ref, whh_b_ref,
                             wfc_ref, bfc_ref,
                             out_ref,
                             hf_sc, cf_sc, hb_sc, cb_sc, *, unroll):
    k = pl.program_id(1)                     # time-chunk index (innermost, "arbitrary")
    num_tt = pl.num_programs(1)
    tt, _, _ = xpf_ref.shape
    Hs = whh_f_ref.shape[0]                  # hidden width used for gate layout
    cdt = whh_f_ref.dtype                    # matmul operand dtype (bf16 or f32)

    @pl.when(k == 0)
    def _():
        hf_sc[...] = jnp.zeros_like(hf_sc)
        cf_sc[...] = jnp.zeros_like(cf_sc)
        hb_sc[...] = jnp.zeros_like(hb_sc)
        cb_sc[...] = jnp.zeros_like(cb_sc)

    lengths = len_ref[...]                   # (tb, 1) int32
    T_total = num_tt * tt
    t0 = k * tt                              # global forward offset of this chunk

    def gates_to_hc(gates, c):
        i = jax.nn.sigmoid(gates[:, 0 * Hs:1 * Hs])
        f = jax.nn.sigmoid(gates[:, 1 * Hs:2 * Hs])
        g = jnp.tanh(gates[:, 2 * Hs:3 * Hs])
        o = jax.nn.sigmoid(gates[:, 3 * Hs:4 * Hs])
        c_new = f * c + i * g
        h_new = o * jnp.tanh(c_new)
        return h_new, c_new

    def body(t, carry):
        h_f, c_f, h_b, c_b = carry
        tg = t0 + t                                          # global forward time

        # ---- forward chain (bias + x@W_ih folded into xpf) ----
        g_f = xpf_ref[t].astype(jnp.float32) + jnp.dot(
            h_f.astype(cdt), whh_f_ref[...], preferred_element_type=jnp.float32)
        hf_new, cf_new = gates_to_hc(g_f, c_f)
        v_f = tg < lengths                                   # "packed" region mask
        h_f = jnp.where(v_f, hf_new, h_f)
        c_f = jnp.where(v_f, cf_new, c_f)

        # ---- backward chain, global time tr = T-1-tg (independent chain, interleaved) ----
        tr = T_total - 1 - tg
        g_b = xpb_ref[tt - 1 - t].astype(jnp.float32) + jnp.dot(
            h_b.astype(cdt), whh_b_ref[...], preferred_element_type=jnp.float32)
        hb_new, cb_new = gates_to_hc(g_b, c_b)
        v_b = tr < lengths                                   # state stays 0 until tr < length
        h_b = jnp.where(v_b, hb_new, h_b)
        c_b = jnp.where(v_b, cb_new, c_b)
        return h_f, c_f, h_b, c_b

    carry0 = (hf_sc[...], cf_sc[...], hb_sc[...], cb_sc[...])
    h_f, c_f, h_b, c_b = lax.fori_loop(0, tt, body, carry0, unroll=unroll)
    hf_sc[...] = h_f
    cf_sc[...] = c_f
    hb_sc[...] = h_b
    cb_sc[...] = c_b

    @pl.when(k == num_tt - 1)
    def _():
        wfc = wfc_ref[...]
        dense = (jnp.dot(h_f.astype(cdt), wfc[0:Hs, :],
                         preferred_element_type=jnp.float32)
                 + jnp.dot(h_b.astype(cdt), wfc[Hs:2 * Hs, :],
                           preferred_element_type=jnp.float32)
                 + bfc_ref[...])
        out_ref[...] = jax.nn.sigmoid(dense)       # lane-dense (tb, Cp) store


# --------------------------------------------------------------------------------------
# Wrapper: embedding gather + hoisted input projections + pallas_call
# --------------------------------------------------------------------------------------
def text_classification_forward(text, text_lengths, params, *,
                                block_b=None, block_t=None,
                                compute_dtype=jnp.bfloat16):
    """text: (B, T) int32 token ids; text_lengths: (B,) int32."""
    emb_tbl = params["embedding"]
    H = params["w_hh_f"].shape[0]
    C = params["fc_w"].shape[1]
    B, T = text.shape

    cdt = jnp.dtype(compute_dtype)
    csz = cdt.itemsize

    # ---- gate-block layout: no 4x/16x over-padding when H is small ----
    if H % 128 == 0:
        Hs, G, per_gate = H, 4 * H, False
    elif H < 128:
        Hs, G, per_gate = H, _round_up(4 * H, 128), False   # pad only the combined 4H
    else:
        Hs, per_gate = _round_up(H, 128), True               # lane-align each gate block
        G = 4 * Hs
    Cp = _round_up(C, 128)                                    # lane-dense output block

    def pad_gate_cols(w):                    # (..., 4H) -> (..., G), zeros in the pad
        if per_gate:
            parts = jnp.split(w, 4, axis=-1)
            pad = [(0, 0)] * (w.ndim - 1) + [(0, Hs - H)]
            return jnp.concatenate([jnp.pad(p, pad) for p in parts], axis=-1)
        pad = [(0, 0)] * (w.ndim - 1) + [(0, G - 4 * H)]
        return jnp.pad(w, pad)

    def pad_state_rows(w):                   # (H, X) -> (Hs, X), zeros in the pad
        return jnp.pad(w, [(0, Hs - H), (0, 0)])

    wih_f = pad_gate_cols(params["w_ih_f"]).astype(cdt)
    wih_b = pad_gate_cols(params["w_ih_b"]).astype(cdt)
    whh_f = pad_state_rows(pad_gate_cols(params["w_hh_f"])).astype(cdt)   # (Hs, G)
    whh_b = pad_state_rows(pad_gate_cols(params["w_hh_b"])).astype(cdt)
    b_f = pad_gate_cols(params["b_f"])                                    # (1, G) f32
    b_b = pad_gate_cols(params["b_b"])
    fc_w = jnp.pad(
        jnp.concatenate([pad_state_rows(params["fc_w"][:H]),
                         pad_state_rows(params["fc_w"][H:])], axis=0),
        [(0, 0), (0, Cp - C)]).astype(cdt)                                # (2Hs, Cp)
    fc_b = jnp.pad(params["fc_b"], [(0, 0), (0, Cp - C)])                 # (1, Cp) f32

    # Time-major embedding gather (no (B,T,E) materialize + transpose of the big tensor).
    emb_tm = jnp.take(emb_tbl, text.T, axis=0).astype(cdt)                # (T, B, E)

    # Hoisted input projections: one big MXU matmul per direction, bias folded in,
    # stored in the compute dtype (halves the dominant HBM/VMEM stream when bf16).
    xpf = (jnp.einsum('tbe,eg->tbg', emb_tm, wih_f,
                      preferred_element_type=jnp.float32) + b_f).astype(cdt)  # (T, B, G)
    xpb = (jnp.einsum('tbe,eg->tbg', emb_tm, wih_b,
                      preferred_element_type=jnp.float32) + b_b).astype(cdt)

    lengths = text_lengths.astype(jnp.int32)[:, None]                     # (B, 1)

    # ---- batch tile: real default so grid > 1 when B allows (pipelining / megacore) ----
    align = 16 if csz == 2 else 8            # bf16 sublane packing
    if block_b is None:
        cands = [d for d in range(align, min(B, 64) + 1, align)
                 if B % d == 0 and B // d >= 2]
        tb = max(cands) if cands else B
    else:
        tb = block_b
    assert B % tb == 0 and (tb == B or tb % align == 0)

    # ---- time tile: bound double-buffered xpf/xpb VMEM independent of T ----
    if block_t is None:
        budget = 8 * 1024 * 1024                              # xpf+xpb, 2 bufs each
        cap = max(1, budget // (4 * tb * G * csz))
        tt = 1
        for d in range(1, T + 1):
            if T % d == 0 and d <= cap:
                tt = d
    else:
        tt = block_t
    assert T % tt == 0
    num_tt = T // tt

    # ---- unroll vs vreg pressure ----
    if tt <= 8:
        unroll = tt
    elif tb * Hs >= 64 * 128:
        unroll = 2
    else:
        unroll = 4

    # ---- derived VMEM limit (capped at 75% of physical VMEM) ----
    try:
        phys = int(pltpu.get_tpu_info().vmem_capacity_bytes)
    except Exception:
        phys = 64 * 1024 * 1024
    block_bytes = (
        2 * 2 * tt * tb * G * csz            # xpf + xpb, double-buffered
        + 2 * 2 * Hs * G * csz               # W_hh fwd/bwd (x2 pipeline bufs)
        + 2 * 2 * Hs * Cp * csz              # fc weight
        + 2 * Cp * 4 + 2 * tb * 4            # fc bias, lengths
        + 2 * tb * Cp * 4                    # out block
        + 4 * tb * Hs * 4)                   # h/c scratch carries
    vmem_limit = min(int(phys * 0.75), max(2 * block_bytes, 16 * 1024 * 1024))
    vmem_limit = max(vmem_limit, block_bytes + (2 << 20))

    grid = (B // tb, num_tt)                 # time axis last (reduction / carry axis)

    grid_spec = pltpu.PrefetchScalarGridSpec(
        num_scalar_prefetch=0,
        grid=grid,
        in_specs=[
            pl.BlockSpec((tb, 1), lambda i, k: (i, 0)),                       # lengths
            pl.BlockSpec((tt, tb, G), lambda i, k: (k, i, 0)),                # fwd chunk
            pl.BlockSpec((tt, tb, G), lambda i, k: (num_tt - 1 - k, i, 0)),   # bwd chunk (reversed)
            pl.BlockSpec((Hs, G), lambda i, k: (0, 0)),                       # W_hh fwd (resident)
            pl.BlockSpec((Hs, G), lambda i, k: (0, 0)),                       # W_hh bwd (resident)
            pl.BlockSpec((2 * Hs, Cp), lambda i, k: (0, 0)),                  # fc weight (resident)
            pl.BlockSpec((1, Cp), lambda i, k: (0, 0)),                       # fc bias (resident)
        ],
        out_specs=pl.BlockSpec((tb, Cp), lambda i, k: (i, 0)),
        scratch_shapes=[pltpu.VMEM((tb, Hs), jnp.float32)] * 4,               # h_f,c_f,h_b,c_b
    )

    out = pl.pallas_call(
        functools.partial(bilstm_classifier_kernel, unroll=unroll),
        out_shape=jax.ShapeDtypeStruct((B, Cp), jnp.float32),
        grid_spec=grid_spec,
        compiler_params=pltpu.CompilerParams(
            dimension_semantics=("parallel", "arbitrary"),
            vmem_limit_bytes=int(vmem_limit),
        ),
    )(lengths, xpf, xpb, whh_f, whh_b, fc_w, fc_b)

    return out[:, :C]


# --------------------------------------------------------------------------------------
# Params + pure-JAX reference (for a correctness check)
# --------------------------------------------------------------------------------------
def init_params(key, vocab_size, embed_dim, hidden_dim, num_class):
    ks = jax.random.split(key, 9)
    s = 0.1
    return {
        "embedding": s * jax.random.normal(ks[0], (vocab_size, embed_dim), jnp.float32),
        "w_ih_f": s * jax.random.normal(ks[1], (embed_dim, 4 * hidden_dim), jnp.float32),
        "w_hh_f": s * jax.random.normal(ks[2], (hidden_dim, 4 * hidden_dim), jnp.float32),
        "b_f":    s * jax.random.normal(ks[3], (1, 4 * hidden_dim), jnp.float32),
        "w_ih_b": s * jax.random.normal(ks[4], (embed_dim, 4 * hidden_dim), jnp.float32),
        "w_hh_b": s * jax.random.normal(ks[5], (hidden_dim, 4 * hidden_dim), jnp.float32),
        "b_b":    s * jax.random.normal(ks[6], (1, 4 * hidden_dim), jnp.float32),
        "fc_w":   s * jax.random.normal(ks[7], (2 * hidden_dim, num_class), jnp.float32),
        "fc_b":   s * jax.random.normal(ks[8], (1, num_class), jnp.float32),
    }


def reference_forward(text, text_lengths, params):
    emb = jnp.take(params["embedding"], text, axis=0)      # (B, T, E)
    B, T, _ = emb.shape
    H = params["w_hh_f"].shape[0]

    def run_dir(w_ih, w_hh, b, reverse):
        h = jnp.zeros((B, H), jnp.float32)
        c = jnp.zeros((B, H), jnp.float32)
        ts = range(T - 1, -1, -1) if reverse else range(T)
        for t in ts:
            gates = emb[:, t] @ w_ih + h @ w_hh + b
            i = jax.nn.sigmoid(gates[:, :H])
            f = jax.nn.sigmoid(gates[:, H:2 * H])
            g = jnp.tanh(gates[:, 2 * H:3 * H])
            o = jax.nn.sigmoid(gates[:, 3 * H:])
            c_new = f * c + i * g
            h_new = o * jnp.tanh(c_new)
            valid = (t < text_lengths)[:, None]
            h = jnp.where(valid, h_new, h)
            c = jnp.where(valid, c_new, c)
        return h

    h_f = run_dir(params["w_ih_f"], params["w_hh_f"], params["b_f"], False)
    h_b = run_dir(params["w_ih_b"], params["w_hh_b"], params["b_b"], True)
    return jax.nn.sigmoid(
        jnp.concatenate([h_f, h_b], axis=1) @ params["fc_w"] + params["fc_b"])


if __name__ == "__main__":
    key = jax.random.PRNGKey(0)
    k_par, k_txt = jax.random.split(key)

    vocab_size, embed_dim, hidden_dim, num_class = 50, 32, 32, 1
    B, T = 8, 8

    params = init_params(k_par, vocab_size, embed_dim, hidden_dim, num_class)

    text = jax.random.randint(k_txt, (B, T), 0, vocab_size, dtype=jnp.int32)
    # pack_padded_sequence expects lengths sorted in decreasing order
    text_lengths = jnp.array([8, 8, 7, 6, 5, 4, 3, 2], dtype=jnp.int32)

    ref = reference_forward(text, text_lengths, params)

    # Default bf16 matmul-operand path; block_t=4 exercises the time-chunked carry logic.
    out = text_classification_forward(text, text_lengths, params, block_t=4)
    out = jax.block_until_ready(out)
    assert out.shape == (B, num_class)
    assert bool(jnp.all(jnp.isfinite(out))) and bool(jnp.all((out > 0) & (out < 1)))
    assert bool(jnp.allclose(out, ref, rtol=3e-2, atol=3e-2)), (out, ref)

    # f32 validation mode (tight tolerance), single time chunk by default.
    out_f32 = text_classification_forward(text, text_lengths, params,
                                          compute_dtype=jnp.float32)
    out_f32 = jax.block_until_ready(out_f32)
    assert bool(jnp.allclose(out_f32, ref, rtol=1e-5, atol=1e-5)), (out_f32, ref)

    print("KERNEL_OK")
</pallas_src>

<mosaic_0001>
module attributes {stable_mosaic.version = 11 : i64} {
  func.func @bilstm_classifier_kernel(%arg0: i32, %arg1: i32, %arg2: memref<8x1xi32, #tpu.memory_space<vmem>>, %arg3: memref<4x8x128xbf16, #tpu.memory_space<vmem>>, %arg4: memref<4x8x128xbf16, #tpu.memory_space<vmem>>, %arg5: memref<32x128xbf16, #tpu.memory_space<vmem>>, %arg6: memref<32x128xbf16, #tpu.memory_space<vmem>>, %arg7: memref<64x128xbf16, #tpu.memory_space<vmem>>, %arg8: memref<1x128xf32, #tpu.memory_space<vmem>>, %arg9: memref<8x128xf32, #tpu.memory_space<vmem>>, %arg10: memref<8x32xf32, #tpu.memory_space<vmem>>, %arg11: memref<8x32xf32, #tpu.memory_space<vmem>>, %arg12: memref<8x32xf32, #tpu.memory_space<vmem>>, %arg13: memref<8x32xf32, #tpu.memory_space<vmem>>) attributes {dimension_semantics = [#tpu.dimension_semantics<parallel>, #tpu.dimension_semantics<arbitrary>], iteration_bounds = array<i64: 1, 2>, scalar_prefetch = 0 : i64, scratch_operands = 4 : i64, tpu.core_type = #tpu.core_type<tc>, window_params = [{transform_indices = @transform_0, window_bounds = array<i64: 8, 1>}, {transform_indices = @transform_1, window_bounds = array<i64: 4, 8, 128>}, {transform_indices = @transform_2, window_bounds = array<i64: 4, 8, 128>}, {pipeline_mode = #tpu.pipeline_mode<synchronous>, transform_indices = @transform_3, window_bounds = array<i64: 32, 128>}, {pipeline_mode = #tpu.pipeline_mode<synchronous>, transform_indices = @transform_4, window_bounds = array<i64: 32, 128>}, {pipeline_mode = #tpu.pipeline_mode<synchronous>, transform_indices = @transform_5, window_bounds = array<i64: 64, 128>}, {pipeline_mode = #tpu.pipeline_mode<synchronous>, transform_indices = @transform_6, window_bounds = array<i64: 1, 128>}, {transform_indices = @transform_7, window_bounds = array<i64: 8, 128>}]} {
    %c0_i32 = arith.constant 0 : i32
    %0 = arith.cmpi eq, %arg1, %c0_i32 : i32
    %1 = arith.extui %0 : i1 to i32
    %c0_i32_0 = arith.constant 0 : i32
    %2 = arith.cmpi ne, %1, %c0_i32_0 : i32
    scf.if %2 {
      %cst_92 = arith.constant 0.000000e+00 : f32
      %356 = vector.broadcast %cst_92 : f32 to vector<8x32xf32>
      %c0_93 = arith.constant 0 : index
      %c0_94 = arith.constant 0 : index
      %357 = vector.load %arg10[%c0_93, %c0_94] : memref<8x32xf32, #tpu.memory_space<vmem>>, vector<8x32xf32>
      tpu.vector_store %arg10[%c0_93, %c0_94], %356 {strides = array<i32>} : memref<8x32xf32, #tpu.memory_space<vmem>>, vector<8x32xf32>,
      %cst_95 = arith.constant 0.000000e+00 : f32
      %358 = vector.broadcast %cst_95 : f32 to vector<8x32xf32>
      %c0_96 = arith.constant 0 : index
      %c0_97 = arith.constant 0 : index
      %359 = vector.load %arg11[%c0_96, %c0_97] : memref<8x32xf32, #tpu.memory_space<vmem>>, vector<8x32xf32>
      tpu.vector_store %arg11[%c0_96, %c0_97], %358 {strides = array<i32>} : memref<8x32xf32, #tpu.memory_space<vmem>>, vector<8x32xf32>,
      %cst_98 = arith.constant 0.000000e+00 : f32
      %360 = vector.broadcast %cst_98 : f32 to vector<8x32xf32>
      %c0_99 = arith.constant 0 : index
      %c0_100 = arith.constant 0 : index
      %361 = vector.load %arg12[%c0_99, %c0_100] : memref<8x32xf32, #tpu.memory_space<vmem>>, vector<8x32xf32>
      tpu.vector_store %arg12[%c0_99, %c0_100], %360 {strides = array<i32>} : memref<8x32xf32, #tpu.memory_space<vmem>>, vector<8x32xf32>,
      %cst_101 = arith.constant 0.000000e+00 : f32
      %362 = vector.broadcast %cst_101 : f32 to vector<8x32xf32>
      %c0_102 = arith.constant 0 : index
      %c0_103 = arith.constant 0 : index
      %363 = vector.load %arg13[%c0_102, %c0_103] : memref<8x32xf32, #tpu.memory_space<vmem>>, vector<8x32xf32>
      tpu.vector_store %arg13[%c0_102, %c0_103], %362 {strides = array<i32>} : memref<8x32xf32, #tpu.memory_space<vmem>>, vector<8x32xf32>,
    } else {
    }
    %c0 = arith.constant 0 : index
    %c0_1 = arith.constant 0 : index
    %3 = vector.load %arg2[%c0, %c0_1] : memref<8x1xi32, #tpu.memory_space<vmem>>, vector<8x1xi32>
    %c4_i32 = arith.constant 4 : i32
    %4 = arith.muli %arg1, %c4_i32 : i32
    %c0_2 = arith.constant 0 : index
    %c0_3 = arith.constant 0 : index
    %5 = vector.load %arg10[%c0_2, %c0_3] : memref<8x32xf32, #tpu.memory_space<vmem>>, vector<8x32xf32>
    %c0_4 = arith.constant 0 : index
    %c0_5 = arith.constant 0 : index
    %6 = vector.load %arg11[%c0_4, %c0_5] : memref<8x32xf32, #tpu.memory_space<vmem>>, vector<8x32xf32>
    %c0_6 = arith.constant 0 : index
    %c0_7 = arith.constant 0 : index
    %7 = vector.load %arg12[%c0_6, %c0_7] : memref<8x32xf32, #tpu.memory_space<vmem>>, vector<8x32xf32>
    %c0_8 = arith.constant 0 : index
    %c0_9 = arith.constant 0 : index
    %8 = vector.load %arg13[%c0_8, %c0_9] : memref<8x32xf32, #tpu.memory_space<vmem>>, vector<8x32xf32>
    %c0_i32_10 = arith.constant 0 : i32
    %9 = arith.addi %4, %c0_i32_10 : i32
    %10 = arith.index_cast %c0_i32_10 : i32 to index
    %c0_11 = arith.constant 0 : index
    %c0_12 = arith.constant 0 : index
    %11 = vector.load %arg3[%10, %c0_11, %c0_12] : memref<4x8x128xbf16, #tpu.memory_space<vmem>>, vector<1x8x128xbf16>
    %12 = vector.shape_cast %11 : vector<1x8x128xbf16> to vector<8x128xbf16>
    %13 = arith.extf %12 : vector<8x128xbf16> to vector<8x128xf32>
    %14 = arith.truncf %5 : vector<8x32xf32> to vector<8x32xbf16>
    %c0_13 = arith.constant 0 : index
    %c0_14 = arith.constant 0 : index
    %15 = vector.load %arg5[%c0_13, %c0_14] : memref<32x128xbf16, #tpu.memory_space<vmem>>, vector<32x128xbf16>
    %cst = arith.constant dense<0.000000e+00> : vector<8x128xf32>
    %16 = tpu.matmul %14, %15, %cst {dimension_numbers = #tpu.dot_dimension_numbers<[1], [0], [0], [1], [0, 0, 1, 1], [], []>} : vector<8x32xbf16>, vector<32x128xbf16>, vector<8x128xf32> -> vector<8x128xf32>
    %17 = arith.addf %13, %16 : vector<8x128xf32>
    %18 = vector.extract_strided_slice %17 {offsets = [0, 0], sizes = [8, 32], strides = [1, 1]} : vector<8x128xf32> to vector<8x32xf32>
    %19 = arith.negf %18 : vector<8x32xf32>
    %20 = math.exp %19 : vector<8x32xf32>
    %cst_15 = arith.constant 1.000000e+00 : f32
    %21 = vector.broadcast %cst_15 : f32 to vector<8x32xf32>
    %22 = arith.addf %21, %20 : vector<8x32xf32>
    %23 = arith.divf %21, %22 : vector<8x32xf32>
    %24 = vector.extract_strided_slice %17 {offsets = [0, 32], sizes = [8, 32], strides = [1, 1]} : vector<8x128xf32> to vector<8x32xf32>
    %25 = arith.negf %24 : vector<8x32xf32>
    %26 = math.exp %25 : vector<8x32xf32>
    %cst_16 = arith.constant 1.000000e+00 : f32
    %27 = vector.broadcast %cst_16 : f32 to vector<8x32xf32>
    %28 = arith.addf %27, %26 : vector<8x32xf32>
    %29 = arith.divf %27, %28 : vector<8x32xf32>
    %30 = vector.extract_strided_slice %17 {offsets = [0, 64], sizes = [8, 32], strides = [1, 1]} : vector<8x128xf32> to vector<8x32xf32>
    %31 = math.tanh %30 : vector<8x32xf32>
    %32 = vector.extract_strided_slice %17 {offsets = [0, 96], sizes = [8, 32], strides = [1, 1]} : vector<8x128xf32> to vector<8x32xf32>
    %33 = arith.negf %32 : vector<8x32xf32>
    %34 = math.exp %33 : vector<8x32xf32>
    %cst_17 = arith.constant 1.000000e+00 : f32
    %35 = vector.broadcast %cst_17 : f32 to vector<8x32xf32>
    %36 = arith.addf %35, %34 : vector<8x32xf32>
    %37 = arith.divf %35, %36 : vector<8x32xf32>
    %38 = arith.mulf %29, %6 : vector<8x32xf32>
    %39 = arith.mulf %23, %31 : vector<8x32xf32>
    %40 = arith.addf %38, %39 : vector<8x32xf32>
    %41 = math.tanh %40 : vector<8x32xf32>
    %42 = arith.mulf %37, %41 : vector<8x32xf32>
    %43 = vector.broadcast %9 : i32 to vector<8x1xi32>
    %44 = arith.cmpi slt, %43, %3 : vector<8x1xi32>
    %45 = vector.shape_cast %44 : vector<8x1xi1> to vector<8x1xi1>
    %46 = vector.broadcast %45 : vector<8x1xi1> to vector<8x32xi1>
    %47 = arith.select %46, %42, %5 : vector<8x32xi1>, vector<8x32xf32>
    %48 = vector.shape_cast %44 : vector<8x1xi1> to vector<8x1xi1>
    %49 = vector.broadcast %48 : vector<8x1xi1> to vector<8x32xi1>
    %50 = arith.select %49, %40, %6 : vector<8x32xi1>, vector<8x32xf32>
    %c7_i32 = arith.constant 7 : i32
    %51 = arith.subi %c7_i32, %9 : i32
    %c3_i32 = arith.constant 3 : i32
    %52 = arith.subi %c3_i32, %c0_i32_10 : i32
    %53 = arith.index_cast %52 : i32 to index
    %c0_18 = arith.constant 0 : index
    %c0_19 = arith.constant 0 : index
    %54 = vector.load %arg4[%53, %c0_18, %c0_19] : memref<4x8x128xbf16, #tpu.memory_space<vmem>>, vector<1x8x128xbf16>
    %55 = vector.shape_cast %54 : vector<1x8x128xbf16> to vector<8x128xbf16>
    %56 = arith.extf %55 : vector<8x128xbf16> to vector<8x128xf32>
    %57 = arith.truncf %7 : vector<8x32xf32> to vector<8x32xbf16>
    %c0_20 = arith.constant 0 : index
    %c0_21 = arith.constant 0 : index
    %58 = vector.load %arg6[%c0_20, %c0_21] : memref<32x128xbf16, #tpu.memory_space<vmem>>, vector<32x128xbf16>
    %cst_22 = arith.constant dense<0.000000e+00> : vector<8x128xf32>
    %59 = tpu.matmul %57, %58, %cst_22 {dimension_numbers = #tpu.dot_dimension_numbers<[1], [0], [0], [1], [0, 0, 1, 1], [], []>} : vector<8x32xbf16>, vector<32x128xbf16>, vector<8x128xf32> -> vector<8x128xf32>
    %60 = arith.addf %56, %59 : vector<8x128xf32>
    %61 = vector.extract_strided_slice %60 {offsets = [0, 0], sizes = [8, 32], strides = [1, 1]} : vector<8x128xf32> to vector<8x32xf32>
    %62 = arith.negf %61 : vector<8x32xf32>
    %63 = math.exp %62 : vector<8x32xf32>
    %cst_23 = arith.constant 1.000000e+00 : f32
    %64 = vector.broadcast %cst_23 : f32 to vector<8x32xf32>
    %65 = arith.addf %64, %63 : vector<8x32xf32>
    %66 = arith.divf %64, %65 : vector<8x32xf32>
    %67 = vector.extract_strided_slice %60 {offsets = [0, 32], sizes = [8, 32], strides = [1, 1]} : vector<8x128xf32> to vector<8x32xf32>
    %68 = arith.negf %67 : vector<8x32xf32>
    %69 = math.exp %68 : vector<8x32xf32>
    %cst_24 = arith.constant 1.000000e+00 : f32
    %70 = vector.broadcast %cst_24 : f32 to vector<8x32xf32>
    %71 = arith.addf %70, %69 : vector<8x32xf32>
    %72 = arith.divf %70, %71 : vector<8x32xf32>
    %73 = vector.extract_strided_slice %60 {offsets = [0, 64], sizes = [8, 32], strides = [1, 1]} : vector<8x128xf32> to vector<8x32xf32>
    %74 = math.tanh %73 : vector<8x32xf32>
    %75 = vector.extract_strided_slice %60 {offsets = [0, 96], sizes = [8, 32], strides = [1, 1]} : vector<8x128xf32> to vector<8x32xf32>
    %76 = arith.negf %75 : vector<8x32xf32>
    %77 = math.exp %76 : vector<8x32xf32>
    %cst_25 = arith.constant 1.000000e+00 : f32
    %78 = vector.broadcast %cst_25 : f32 to vector<8x32xf32>
    %79 = arith.addf %78, %77 : vector<8x32xf32>
    %80 = arith.divf %78, %79 : vector<8x32xf32>
    %81 = arith.mulf %72, %8 : vector<8x32xf32>
    %82 = arith.mulf %66, %74 : vector<8x32xf32>
    %83 = arith.addf %81, %82 : vector<8x32xf32>
    %84 = math.tanh %83 : vector<8x32xf32>
    %85 = arith.mulf %80, %84 : vector<8x32xf32>
    %86 = vector.broadcast %51 : i32 to vector<8x1xi32>
    %87 = arith.cmpi slt, %86, %3 : vector<8x1xi32>
    %88 = vector.shape_cast %87 : vector<8x1xi1> to vector<8x1xi1>
    %89 = vector.broadcast %88 : vector<8x1xi1> to vector<8x32xi1>
    %90 = arith.select %89, %85, %7 : vector<8x32xi1>, vector<8x32xf32>
    %91 = vector.shape_cast %87 : vector<8x1xi1> to vector<8x1xi1>
    %92 = vector.broadcast %91 : vector<8x1xi1> to vector<8x32xi1>
    %93 = arith.select %92, %83, %8 : vector<8x32xi1>, vector<8x32xf32>
    %c1_i32 = arith.constant 1 : i32
    %94 = arith.addi %4, %c1_i32 : i32
    %95 = arith.index_cast %c1_i32 : i32 to index
    %c0_26 = arith.constant 0 : index
    %c0_27 = arith.constant 0 : index
    %96 = vector.load %arg3[%95, %c0_26, %c0_27] : memref<4x8x128xbf16, #tpu.memory_space<vmem>>, vector<1x8x128xbf16>
    %97 = vector.shape_cast %96 : vector<1x8x128xbf16> to vector<8x128xbf16>
    %98 = arith.extf %97 : vector<8x128xbf16> to vector<8x128xf32>
    %99 = arith.truncf %47 : vector<8x32xf32> to vector<8x32xbf16>
    %c0_28 = arith.constant 0 : index
    %c0_29 = arith.constant 0 : index
    %100 = vector.load %arg5[%c0_28, %c0_29] : memref<32x128xbf16, #tpu.memory_space<vmem>>, vector<32x128xbf16>
    %cst_30 = arith.constant dense<0.000000e+00> : vector<8x128xf32>
    %101 = tpu.matmul %99, %100, %cst_30 {dimension_numbers = #tpu.dot_dimension_numbers<[1], [0], [0], [1], [0, 0, 1, 1], [], []>} : vector<8x32xbf16>, vector<32x128xbf16>, vector<8x128xf32> -> vector<8x128xf32>
    %102 = arith.addf %98, %101 : vector<8x128xf32>
    %103 = vector.extract_strided_slice %102 {offsets = [0, 0], sizes = [8, 32], strides = [1, 1]} : vector<8x128xf32> to vector<8x32xf32>
    %104 = arith.negf %103 : vector<8x32xf32>
    %105 = math.exp %104 : vector<8x32xf32>
    %cst_31 = arith.constant 1.000000e+00 : f32
    %106 = vector.broadcast %cst_31 : f32 to vector<8x32xf32>
    %107 = arith.addf %106, %105 : vector<8x32xf32>
    %108 = arith.divf %106, %107 : vector<8x32xf32>
    %109 = vector.extract_strided_slice %102 {offsets = [0, 32], sizes = [8, 32], strides = [1, 1]} : vector<8x128xf32> to vector<8x32xf32>
    %110 = arith.negf %109 : vector<8x32xf32>
    %111 = math.exp %110 : vector<8x32xf32>
    %cst_32 = arith.constant 1.000000e+00 : f32
    %112 = vector.broadcast %cst_32 : f32 to vector<8x32xf32>
    %113 = arith.addf %112, %111 : vector<8x32xf32>
    %114 = arith.divf %112, %113 : vector<8x32xf32>
    %115 = vector.extract_strided_slice %102 {offsets = [0, 64], sizes = [8, 32], strides = [1, 1]} : vector<8x128xf32> to vector<8x32xf32>
    %116 = math.tanh %115 : vector<8x32xf32>
    %117 = vector.extract_strided_slice %102 {offsets = [0, 96], sizes = [8, 32], strides = [1, 1]} : vector<8x128xf32> to vector<8x32xf32>
    %118 = arith.negf %117 : vector<8x32xf32>
    %119 = math.exp %118 : vector<8x32xf32>
    %cst_33 = arith.constant 1.000000e+00 : f32
    %120 = vector.broadcast %cst_33 : f32 to vector<8x32xf32>
    %121 = arith.addf %120, %119 : vector<8x32xf32>
    %122 = arith.divf %120, %121 : vector<8x32xf32>
    %123 = arith.mulf %114, %50 : vector<8x32xf32>
    %124 = arith.mulf %108, %116 : vector<8x32xf32>
    %125 = arith.addf %123, %124 : vector<8x32xf32>
    %126 = math.tanh %125 : vector<8x32xf32>
    %127 = arith.mulf %122, %126 : vector<8x32xf32>
    %128 = vector.broadcast %94 : i32 to vector<8x1xi32>
    %129 = arith.cmpi slt, %128, %3 : vector<8x1xi32>
    %130 = vector.shape_cast %129 : vector<8x1xi1> to vector<8x1xi1>
    %131 = vector.broadcast %130 : vector<8x1xi1> to vector<8x32xi1>
    %132 = arith.select %131, %127, %47 : vector<8x32xi1>, vector<8x32xf32>
    %133 = vector.shape_cast %129 : vector<8x1xi1> to vector<8x1xi1>
    %134 = vector.broadcast %133 : vector<8x1xi1> to vector<8x32xi1>
    %135 = arith.select %134, %125, %50 : vector<8x32xi1>, vector<8x32xf32>
    %c7_i32_34 = arith.constant 7 : i32
    %136 = arith.subi %c7_i32_34, %94 : i32
    %c3_i32_35 = arith.constant 3 : i32
    %137 = arith.subi %c3_i32_35, %c1_i32 : i32
    %138 = arith.index_cast %137 : i32 to index
    %c0_36 = arith.constant 0 : index
    %c0_37 = arith.constant 0 : index
    %139 = vector.load %arg4[%138, %c0_36, %c0_37] : memref<4x8x128xbf16, #tpu.memory_space<vmem>>, vector<1x8x128xbf16>
    %140 = vector.shape_cast %139 : vector<1x8x128xbf16> to vector<8x128xbf16>
    %141 = arith.extf %140 : vector<8x128xbf16> to vector<8x128xf32>
    %142 = arith.truncf %90 : vector<8x32xf32> to vector<8x32xbf16>
    %c0_38 = arith.constant 0 : index
    %c0_39 = arith.constant 0 : index
    %143 = vector.load %arg6[%c0_38, %c0_39] : memref<32x128xbf16, #tpu.memory_space<vmem>>, vector<32x128xbf16>
    %cst_40 = arith.constant dense<0.000000e+00> : vector<8x128xf32>
    %144 = tpu.matmul %142, %143, %cst_40 {dimension_numbers = #tpu.dot_dimension_numbers<[1], [0], [0], [1], [0, 0, 1, 1], [], []>} : vector<8x32xbf16>, vector<32x128xbf16>, vector<8x128xf32> -> vector<8x128xf32>
    %145 = arith.addf %141, %144 : vector<8x128xf32>
    %146 = vector.extract_strided_slice %145 {offsets = [0, 0], sizes = [8, 32], strides = [1, 1]} : vector<8x128xf32> to vector<8x32xf32>
    %147 = arith.negf %146 : vector<8x32xf32>
    %148 = math.exp %147 : vector<8x32xf32>
    %cst_41 = arith.constant 1.000000e+00 : f32
    %149 = vector.broadcast %cst_41 : f32 to vector<8x32xf32>
    %150 = arith.addf %149, %148 : vector<8x32xf32>
    %151 = arith.divf %149, %150 : vector<8x32xf32>
    %152 = vector.extract_strided_slice %145 {offsets = [0, 32], sizes = [8, 32], strides = [1, 1]} : vector<8x128xf32> to vector<8x32xf32>
    %153 = arith.negf %152 : vector<8x32xf32>
    %154 = math.exp %153 : vector<8x32xf32>
    %cst_42 = arith.constant 1.000000e+00 : f32
    %155 = vector.broadcast %cst_42 : f32 to vector<8x32xf32>
    %156 = arith.addf %155, %154 : vector<8x32xf32>
    %157 = arith.divf %155, %156 : vector<8x32xf32>
    %158 = vector.extract_strided_slice %145 {offsets = [0, 64], sizes = [8, 32], strides = [1, 1]} : vector<8x128xf32> to vector<8x32xf32>
    %159 = math.tanh %158 : vector<8x32xf32>
    %160 = vector.extract_strided_slice %145 {offsets = [0, 96], sizes = [8, 32], strides = [1, 1]} : vector<8x128xf32> to vector<8x32xf32>
    %161 = arith.negf %160 : vector<8x32xf32>
    %162 = math.exp %161 : vector<8x32xf32>
    %cst_43 = arith.constant 1.000000e+00 : f32
    %163 = vector.broadcast %cst_43 : f32 to vector<8x32xf32>
    %164 = arith.addf %163, %162 : vector<8x32xf32>
    %165 = arith.divf %163, %164 : vector<8x32xf32>
    %166 = arith.mulf %157, %93 : vector<8x32xf32>
    %167 = arith.mulf %151, %159 : vector<8x32xf32>
    %168 = arith.addf %166, %167 : vector<8x32xf32>
    %169 = math.tanh %168 : vector<8x32xf32>
    %170 = arith.mulf %165, %169 : vector<8x32xf32>
    %171 = vector.broadcast %136 : i32 to vector<8x1xi32>
    %172 = arith.cmpi slt, %171, %3 : vector<8x1xi32>
    %173 = vector.shape_cast %172 : vector<8x1xi1> to vector<8x1xi1>
    %174 = vector.broadcast %173 : vector<8x1xi1> to vector<8x32xi1>
    %175 = arith.select %174, %170, %90 : vector<8x32xi1>, vector<8x32xf32>
    %176 = vector.shape_cast %172 : vector<8x1xi1> to vector<8x1xi1>
    %177 = vector.broadcast %176 : vector<8x1xi1> to vector<8x32xi1>
    %178 = arith.select %177, %168, %93 : vector<8x32xi1>, vector<8x32xf32>
    %c2_i32 = arith.constant 2 : i32
    %179 = arith.addi %4, %c2_i32 : i32
    %180 = arith.index_cast %c2_i32 : i32 to index
    %c0_44 = arith.constant 0 : index
    %c0_45 = arith.constant 0 : index
    %181 = vector.load %arg3[%180, %c0_44, %c0_45] : memref<4x8x128xbf16, #tpu.memory_space<vmem>>, vector<1x8x128xbf16>
    %182 = vector.shape_cast %181 : vector<1x8x128xbf16> to vector<8x128xbf16>
    %183 = arith.extf %182 : vector<8x128xbf16> to vector<8x128xf32>
    %184 = arith.truncf %132 : vector<8x32xf32> to vector<8x32xbf16>
    %c0_46 = arith.constant 0 : index
    %c0_47 = arith.constant 0 : index
    %185 = vector.load %arg5[%c0_46, %c0_47] : memref<32x128xbf16, #tpu.memory_space<vmem>>, vector<32x128xbf16>
    %cst_48 = arith.constant dense<0.000000e+00> : vector<8x128xf32>
    %186 = tpu.matmul %184, %185, %cst_48 {dimension_numbers = #tpu.dot_dimension_numbers<[1], [0], [0], [1], [0, 0, 1, 1], [], []>} : vector<8x32xbf16>, vector<32x128xbf16>, vector<8x128xf32> -> vector<8x128xf32>
    %187 = arith.addf %183, %186 : vector<8x128xf32>
    %188 = vector.extract_strided_slice %187 {offsets = [0, 0], sizes = [8, 32], strides = [1, 1]} : vector<8x128xf32> to vector<8x32xf32>
    %189 = arith.negf %188 : vector<8x32xf32>
    %190 = math.exp %189 : vector<8x32xf32>
    %cst_49 = arith.constant 1.000000e+00 : f32
    %191 = vector.broadcast %cst_49 : f32 to vector<8x32xf32>
    %192 = arith.addf %191, %190 : vector<8x32xf32>
    %193 = arith.divf %191, %192 : vector<8x32xf32>
    %194 = vector.extract_strided_slice %187 {offsets = [0, 32], sizes = [8, 32], strides = [1, 1]} : vector<8x128xf32> to vector<8x32xf32>
    %195 = arith.negf %194 : vector<8x32xf32>
    %196 = math.exp %195 : vector<8x32xf32>
    %cst_50 = arith.constant 1.000000e+00 : f32
    %197 = vector.broadcast %cst_50 : f32 to vector<8x32xf32>
    %198 = arith.addf %197, %196 : vector<8x32xf32>
    %199 = arith.divf %197, %198 : vector<8x32xf32>
    %200 = vector.extract_strided_slice %187 {offsets = [0, 64], sizes = [8, 32], strides = [1, 1]} : vector<8x128xf32> to vector<8x32xf32>
    %201 = math.tanh %200 : vector<8x32xf32>
    %202 = vector.extract_strided_slice %187 {offsets = [0, 96], sizes = [8, 32], strides = [1, 1]} : vector<8x128xf32> to vector<8x32xf32>
    %203 = arith.negf %202 : vector<8x32xf32>
    %204 = math.exp %203 : vector<8x32xf32>
    %cst_51 = arith.constant 1.000000e+00 : f32
    %205 = vector.broadcast %cst_51 : f32 to vector<8x32xf32>
    %206 = arith.addf %205, %204 : vector<8x32xf32>
    %207 = arith.divf %205, %206 : vector<8x32xf32>
    %208 = arith.mulf %199, %135 : vector<8x32xf32>
    %209 = arith.mulf %193, %201 : vector<8x32xf32>
    %210 = arith.addf %208, %209 : vector<8x32xf32>
    %211 = math.tanh %210 : vector<8x32xf32>
    %212 = arith.mulf %207, %211 : vector<8x32xf32>
    %213 = vector.broadcast %179 : i32 to vector<8x1xi32>
    %214 = arith.cmpi slt, %213, %3 : vector<8x1xi32>
    %215 = vector.shape_cast %214 : vector<8x1xi1> to vector<8x1xi1>
    %216 = vector.broadcast %215 : vector<8x1xi1> to vector<8x32xi1>
    %217 = arith.select %216, %212, %132 : vector<8x32xi1>, vector<8x32xf32>
    %218 = vector.shape_cast %214 : vector<8x1xi1> to vector<8x1xi1>
    %219 = vector.broadcast %218 : vector<8x1xi1> to vector<8x32xi1>
    %220 = arith.select %219, %210, %135 : vector<8x32xi1>, vector<8x32xf32>
    %c7_i32_52 = arith.constant 7 : i32
    %221 = arith.subi %c7_i32_52, %179 : i32
    %c3_i32_53 = arith.constant 3 : i32
    %222 = arith.subi %c3_i32_53, %c2_i32 : i32
    %223 = arith.index_cast %222 : i32 to index
    %c0_54 = arith.constant 0 : index
    %c0_55 = arith.constant 0 : index
    %224 = vector.load %arg4[%223, %c0_54, %c0_55] : memref<4x8x128xbf16, #tpu.memory_space<vmem>>, vector<1x8x128xbf16>
    %225 = vector.shape_cast %224 : vector<1x8x128xbf16> to vector<8x128xbf16>
    %226 = arith.extf %225 : vector<8x128xbf16> to vector<8x128xf32>
    %227 = arith.truncf %175 : vector<8x32xf32> to vector<8x32xbf16>
    %c0_56 = arith.constant 0 : index
    %c0_57 = arith.constant 0 : index
    %228 = vector.load %arg6[%c0_56, %c0_57] : memref<32x128xbf16, #tpu.memory_space<vmem>>, vector<32x128xbf16>
    %cst_58 = arith.constant dense<0.000000e+00> : vector<8x128xf32>
    %229 = tpu.matmul %227, %228, %cst_58 {dimension_numbers = #tpu.dot_dimension_numbers<[1], [0], [0], [1], [0, 0, 1, 1], [], []>} : vector<8x32xbf16>, vector<32x128xbf16>, vector<8x128xf32> -> vector<8x128xf32>
    %230 = arith.addf %226, %229 : vector<8x128xf32>
    %231 = vector.extract_strided_slice %230 {offsets = [0, 0], sizes = [8, 32], strides = [1, 1]} : vector<8x128xf32> to vector<8x32xf32>
    %232 = arith.negf %231 : vector<8x32xf32>
    %233 = math.exp %232 : vector<8x32xf32>
    %cst_59 = arith.constant 1.000000e+00 : f32
    %234 = vector.broadcast %cst_59 : f32 to vector<8x32xf32>
    %235 = arith.addf %234, %233 : vector<8x32xf32>
    %236 = arith.divf %234, %235 : vector<8x32xf32>
    %237 = vector.extract_strided_slice %230 {offsets = [0, 32], sizes = [8, 32], strides = [1, 1]} : vector<8x128xf32> to vector<8x32xf32>
    %238 = arith.negf %237 : vector<8x32xf32>
    %239 = math.exp %238 : vector<8x32xf32>
    %cst_60 = arith.constant 1.000000e+00 : f32
    %240 = vector.broadcast %cst_60 : f32 to vector<8x32xf32>
    %241 = arith.addf %240, %239 : vector<8x32xf32>
    %242 = arith.divf %240, %241 : vector<8x32xf32>
    %243 = vector.extract_strided_slice %230 {offsets = [0, 64], sizes = [8, 32], strides = [1, 1]} : vector<8x128xf32> to vector<8x32xf32>
    %244 = math.tanh %243 : vector<8x32xf32>
    %245 = vector.extract_strided_slice %230 {offsets = [0, 96], sizes = [8, 32], strides = [1, 1]} : vector<8x128xf32> to vector<8x32xf32>
    %246 = arith.negf %245 : vector<8x32xf32>
    %247 = math.exp %246 : vector<8x32xf32>
    %cst_61 = arith.constant 1.000000e+00 : f32
    %248 = vector.broadcast %cst_61 : f32 to vector<8x32xf32>
    %249 = arith.addf %248, %247 : vector<8x32xf32>
    %250 = arith.divf %248, %249 : vector<8x32xf32>
    %251 = arith.mulf %242, %178 : vector<8x32xf32>
    %252 = arith.mulf %236, %244 : vector<8x32xf32>
    %253 = arith.addf %251, %252 : vector<8x32xf32>
    %254 = math.tanh %253 : vector<8x32xf32>
    %255 = arith.mulf %250, %254 : vector<8x32xf32>
    %256 = vector.broadcast %221 : i32 to vector<8x1xi32>
    %257 = arith.cmpi slt, %256, %3 : vector<8x1xi32>
    %258 = vector.shape_cast %257 : vector<8x1xi1> to vector<8x1xi1>
    %259 = vector.broadcast %258 : vector<8x1xi1> to vector<8x32xi1>
    %260 = arith.select %259, %255, %175 : vector<8x32xi1>, vector<8x32xf32>
    %261 = vector.shape_cast %257 : vector<8x1xi1> to vector<8x1xi1>
    %262 = vector.broadcast %261 : vector<8x1xi1> to vector<8x32xi1>
    %263 = arith.select %262, %253, %178 : vector<8x32xi1>, vector<8x32xf32>
    %c3_i32_62 = arith.constant 3 : i32
    %264 = arith.addi %4, %c3_i32_62 : i32
    %265 = arith.index_cast %c3_i32_62 : i32 to index
    %c0_63 = arith.constant 0 : index
    %c0_64 = arith.constant 0 : index
    %266 = vector.load %arg3[%265, %c0_63, %c0_64] : memref<4x8x128xbf16, #tpu.memory_space<vmem>>, vector<1x8x128xbf16>
    %267 = vector.shape_cast %266 : vector<1x8x128xbf16> to vector<8x128xbf16>
    %268 = arith.extf %267 : vector<8x128xbf16> to vector<8x128xf32>
    %269 = arith.truncf %217 : vector<8x32xf32> to vector<8x32xbf16>
    %c0_65 = arith.constant 0 : index
    %c0_66 = arith.constant 0 : index
    %270 = vector.load %arg5[%c0_65, %c0_66] : memref<32x128xbf16, #tpu.memory_space<vmem>>, vector<32x128xbf16>
    %cst_67 = arith.constant dense<0.000000e+00> : vector<8x128xf32>
    %271 = tpu.matmul %269, %270, %cst_67 {dimension_numbers = #tpu.dot_dimension_numbers<[1], [0], [0], [1], [0, 0, 1, 1], [], []>} : vector<8x32xbf16>, vector<32x128xbf16>, vector<8x128xf32> -> vector<8x128xf32>
    %272 = arith.addf %268, %271 : vector<8x128xf32>
    %273 = vector.extract_strided_slice %272 {offsets = [0, 0], sizes = [8, 32], strides = [1, 1]} : vector<8x128xf32> to vector<8x32xf32>
    %274 = arith.negf %273 : vector<8x32xf32>
    %275 = math.exp %274 : vector<8x32xf32>
    %cst_68 = arith.constant 1.000000e+00 : f32
    %276 = vector.broadcast %cst_68 : f32 to vector<8x32xf32>
    %277 = arith.addf %276, %275 : vector<8x32xf32>
    %278 = arith.divf %276, %277 : vector<8x32xf32>
    %279 = vector.extract_strided_slice %272 {offsets = [0, 32], sizes = [8, 32], strides = [1, 1]} : vector<8x128xf32> to vector<8x32xf32>
    %280 = arith.negf %279 : vector<8x32xf32>
    %281 = math.exp %280 : vector<8x32xf32>
    %cst_69 = arith.constant 1.000000e+00 : f32
    %282 = vector.broadcast %cst_69 : f32 to vector<8x32xf32>
    %283 = arith.addf %282, %281 : vector<8x32xf32>
    %284 = arith.divf %282, %283 : vector<8x32xf32>
    %285 = vector.extract_strided_slice %272 {offsets = [0, 64], sizes = [8, 32], strides = [1, 1]} : vector<8x128xf32> to vector<8x32xf32>
    %286 = math.tanh %285 : vector<8x32xf32>
    %287 = vector.extract_strided_slice %272 {offsets = [0, 96], sizes = [8, 32], strides = [1, 1]} : vector<8x128xf32> to vector<8x32xf32>
    %288 = arith.negf %287 : vector<8x32xf32>
    %289 = math.exp %288 : vector<8x32xf32>
    %cst_70 = arith.constant 1.000000e+00 : f32
    %290 = vector.broadcast %cst_70 : f32 to vector<8x32xf32>
    %291 = arith.addf %290, %289 : vector<8x32xf32>
    %292 = arith.divf %290, %291 : vector<8x32xf32>
    %293 = arith.mulf %284, %220 : vector<8x32xf32>
    %294 = arith.mulf %278, %286 : vector<8x32xf32>
    %295 = arith.addf %293, %294 : vector<8x32xf32>
    %296 = math.tanh %295 : vector<8x32xf32>
    %297 = arith.mulf %292, %296 : vector<8x32xf32>
    %298 = vector.broadcast %264 : i32 to vector<8x1xi32>
    %299 = arith.cmpi slt, %298, %3 : vector<8x1xi32>
    %300 = vector.shape_cast %299 : vector<8x1xi1> to vector<8x1xi1>
    %301 = vector.broadcast %300 : vector<8x1xi1> to vector<8x32xi1>
    %302 = arith.select %301, %297, %217 : vector<8x32xi1>, vector<8x32xf32>
    %303 = vector.shape_cast %299 : vector<8x1xi1> to vector<8x1xi1>
    %304 = vector.broadcast %303 : vector<8x1xi1> to vector<8x32xi1>
    %305 = arith.select %304, %295, %220 : vector<8x32xi1>, vector<8x32xf32>
    %c7_i32_71 = arith.constant 7 : i32
    %306 = arith.subi %c7_i32_71, %264 : i32
    %c3_i32_72 = arith.constant 3 : i32
    %307 = arith.subi %c3_i32_72, %c3_i32_62 : i32
    %308 = arith.index_cast %307 : i32 to index
    %c0_73 = arith.constant 0 : index
    %c0_74 = arith.constant 0 : index
    %309 = vector.load %arg4[%308, %c0_73, %c0_74] : memref<4x8x128xbf16, #tpu.memory_space<vmem>>, vector<1x8x128xbf16>
    %310 = vector.shape_cast %309 : vector<1x8x128xbf16> to vector<8x128xbf16>
    %311 = arith.extf %310 : vector<8x128xbf16> to vector<8x128xf32>
    %312 = arith.truncf %260 : vector<8x32xf32> to vector<8x32xbf16>
    %c0_75 = arith.constant 0 : index
    %c0_76 = arith.constant 0 : index
    %313 = vector.load %arg6[%c0_75, %c0_76] : memref<32x128xbf16, #tpu.memory_space<vmem>>, vector<32x128xbf16>
    %cst_77 = arith.constant dense<0.000000e+00> : vector<8x128xf32>
    %314 = tpu.matmul %312, %313, %cst_77 {dimension_numbers = #tpu.dot_dimension_numbers<[1], [0], [0], [1], [0, 0, 1, 1], [], []>} : vector<8x32xbf16>, vector<32x128xbf16>, vector<8x128xf32> -> vector<8x128xf32>
    %315 = arith.addf %311, %314 : vector<8x128xf32>
    %316 = vector.extract_strided_slice %315 {offsets = [0, 0], sizes = [8, 32], strides = [1, 1]} : vector<8x128xf32> to vector<8x32xf32>
    %317 = arith.negf %316 : vector<8x32xf32>
    %318 = math.exp %317 : vector<8x32xf32>
    %cst_78 = arith.constant 1.000000e+00 : f32
    %319 = vector.broadcast %cst_78 : f32 to vector<8x32xf32>
    %320 = arith.addf %319, %318 : vector<8x32xf32>
    %321 = arith.divf %319, %320 : vector<8x32xf32>
    %322 = vector.extract_strided_slice %315 {offsets = [0, 32], sizes = [8, 32], strides = [1, 1]} : vector<8x128xf32> to vector<8x32xf32>
    %323 = arith.negf %322 : vector<8x32xf32>
    %324 = math.exp %323 : vector<8x32xf32>
    %cst_79 = arith.constant 1.000000e+00 : f32
    %325 = vector.broadcast %cst_79 : f32 to vector<8x32xf32>
    %326 = arith.addf %325, %324 : vector<8x32xf32>
    %327 = arith.divf %325, %326 : vector<8x32xf32>
    %328 = vector.extract_strided_slice %315 {offsets = [0, 64], sizes = [8, 32], strides = [1, 1]} : vector<8x128xf32> to vector<8x32xf32>
    %329 = math.tanh %328 : vector<8x32xf32>
    %330 = vector.extract_strided_slice %315 {offsets = [0, 96], sizes = [8, 32], strides = [1, 1]} : vector<8x128xf32> to vector<8x32xf32>
    %331 = arith.negf %330 : vector<8x32xf32>
    %332 = math.exp %331 : vector<8x32xf32>
    %cst_80 = arith.constant 1.000000e+00 : f32
    %333 = vector.broadcast %cst_80 : f32 to vector<8x32xf32>
    %334 = arith.addf %333, %332 : vector<8x32xf32>
    %335 = arith.divf %333, %334 : vector<8x32xf32>
    %336 = arith.mulf %327, %263 : vector<8x32xf32>
    %337 = arith.mulf %321, %329 : vector<8x32xf32>
    %338 = arith.addf %336, %337 : vector<8x32xf32>
    %339 = math.tanh %338 : vector<8x32xf32>
    %340 = arith.mulf %335, %339 : vector<8x32xf32>
    %341 = vector.broadcast %306 : i32 to vector<8x1xi32>
    %342 = arith.cmpi slt, %341, %3 : vector<8x1xi32>
    %343 = vector.shape_cast %342 : vector<8x1xi1> to vector<8x1xi1>
    %344 = vector.broadcast %343 : vector<8x1xi1> to vector<8x32xi1>
    %345 = arith.select %344, %340, %260 : vector<8x32xi1>, vector<8x32xf32>
    %346 = vector.shape_cast %342 : vector<8x1xi1> to vector<8x1xi1>
    %347 = vector.broadcast %346 : vector<8x1xi1> to vector<8x32xi1>
    %348 = arith.select %347, %338, %263 : vector<8x32xi1>, vector<8x32xf32>
    %c4_i32_81 = arith.constant 4 : i32
    %c0_82 = arith.constant 0 : index
    %c0_83 = arith.constant 0 : index
    %349 = vector.load %arg10[%c0_82, %c0_83] : memref<8x32xf32, #tpu.memory_space<vmem>>, vector<8x32xf32>
    tpu.vector_store %arg10[%c0_82, %c0_83], %302 {strides = array<i32>} : memref<8x32xf32, #tpu.memory_space<vmem>>, vector<8x32xf32>,
    %c0_84 = arith.constant 0 : index
    %c0_85 = arith.constant 0 : index
    %350 = vector.load %arg11[%c0_84, %c0_85] : memref<8x32xf32, #tpu.memory_space<vmem>>, vector<8x32xf32>
    tpu.vector_store %arg11[%c0_84, %c0_85], %305 {strides = array<i32>} : memref<8x32xf32, #tpu.memory_space<vmem>>, vector<8x32xf32>,
    %c0_86 = arith.constant 0 : index
    %c0_87 = arith.constant 0 : index
    %351 = vector.load %arg12[%c0_86, %c0_87] : memref<8x32xf32, #tpu.memory_space<vmem>>, vector<8x32xf32>
    tpu.vector_store %arg12[%c0_86, %c0_87], %345 {strides = array<i32>} : memref<8x32xf32, #tpu.memory_space<vmem>>, vector<8x32xf32>,
    %c0_88 = arith.constant 0 : index
    %c0_89 = arith.constant 0 : index
    %352 = vector.load %arg13[%c0_88, %c0_89] : memref<8x32xf32, #tpu.memory_space<vmem>>, vector<8x32xf32>
    tpu.vector_store %arg13[%c0_88, %c0_89], %348 {strides = array<i32>} : memref<8x32xf32, #tpu.memory_space<vmem>>, vector<8x32xf32>,
    %c1_i32_90 = arith.constant 1 : i32
    %353 = arith.cmpi eq, %arg1, %c1_i32_90 : i32
    %354 = arith.extui %353 : i1 to i32
    %c0_i32_91 = arith.constant 0 : i32
    %355 = arith.cmpi ne, %354, %c0_i32_91 : i32
    scf.if %355 {
      %c0_92 = arith.constant 0 : index
      %c0_93 = arith.constant 0 : index
      %356 = vector.load %arg7[%c0_92, %c0_93] : memref<64x128xbf16, #tpu.memory_space<vmem>>, vector<64x128xbf16>
      %357 = arith.truncf %302 : vector<8x32xf32> to vector<8x32xbf16>
      %358 = vector.extract_strided_slice %356 {offsets = [0, 0], sizes = [32, 128], strides = [1, 1]} : vector<64x128xbf16> to vector<32x128xbf16>
      %cst_94 = arith.constant dense<0.000000e+00> : vector<8x128xf32>
      %359 = tpu.matmul %357, %358, %cst_94 {dimension_numbers = #tpu.dot_dimension_numbers<[1], [0], [0], [1], [0, 0, 1, 1], [], []>} : vector<8x32xbf16>, vector<32x128xbf16>, vector<8x128xf32> -> vector<8x128xf32>
      %360 = arith.truncf %345 : vector<8x32xf32> to vector<8x32xbf16>
      %361 = vector.extract_strided_slice %356 {offsets = [32, 0], sizes = [32, 128], strides = [1, 1]} : vector<64x128xbf16> to vector<32x128xbf16>
      %cst_95 = arith.constant dense<0.000000e+00> : vector<8x128xf32>
      %362 = tpu.matmul %360, %361, %cst_95 {dimension_numbers = #tpu.dot_dimension_numbers<[1], [0], [0], [1], [0, 0, 1, 1], [], []>} : vector<8x32xbf16>, vector<32x128xbf16>, vector<8x128xf32> -> vector<8x128xf32>
      %363 = arith.addf %359, %362 : vector<8x128xf32>
      %c0_96 = arith.constant 0 : index
      %c0_97 = arith.constant 0 : index
      %364 = vector.load %arg8[%c0_96, %c0_97] : memref<1x128xf32, #tpu.memory_space<vmem>>, vector<1x128xf32>
      %365 = vector.broadcast %364 : vector<1x128xf32> to vector<8x128xf32>
      %366 = arith.addf %363, %365 : vector<8x128xf32>
      %367 = arith.negf %366 : vector<8x128xf32>
      %368 = math.exp %367 : vector<8x128xf32>
      %cst_98 = arith.constant 1.000000e+00 : f32
      %369 = vector.broadcast %cst_98 : f32 to vector<8x128xf32>
      %370 = arith.addf %369, %368 : vector<8x128xf32>
      %371 = arith.divf %369, %370 : vector<8x128xf32>
      %c0_99 = arith.constant 0 : index
      %c0_100 = arith.constant 0 : index
      %372 = vector.load %arg9[%c0_99, %c0_100] : memref<8x128xf32, #tpu.memory_space<vmem>>, vector<8x128xf32>
      tpu.vector_store %arg9[%c0_99, %c0_100], %371 {strides = array<i32>} : memref<8x128xf32, #tpu.memory_space<vmem>>, vector<8x128xf32>,
    } else {
    }
    return
  }
  func.func @transform_0(%arg0: i32, %arg1: i32) -> (i32, i32) {
    %c0_i32 = arith.constant 0 : i32
    %c0_i32_0 = arith.constant 0 : i32
    return %arg0, %c0_i32 : i32, i32
  }
  func.func @transform_1(%arg0: i32, %arg1: i32) -> (i32, i32, i32) {
    %c0_i32 = arith.constant 0 : i32
    %c0_i32_0 = arith.constant 0 : i32
    return %arg1, %arg0, %c0_i32 : i32, i32, i32
  }
  func.func @transform_2(%arg0: i32, %arg1: i32) -> (i32, i32, i32) {
    %c1_i32 = arith.constant 1 : i32
    %0 = arith.subi %c1_i32, %arg1 : i32
    %c0_i32 = arith.constant 0 : i32
    %c0_i32_0 = arith.constant 0 : i32
    return %0, %arg0, %c0_i32 : i32, i32, i32
  }
  func.func @transform_3(%arg0: i32, %arg1: i32) -> (i32, i32) {
    %c0_i32 = arith.constant 0 : i32
    %c0_i32_0 = arith.constant 0 : i32
    %c0_i32_1 = arith.constant 0 : i32
    return %c0_i32, %c0_i32_0 : i32, i32
  }
  func.func @transform_4(%arg0: i32, %arg1: i32) -> (i32, i32) {
    %c0_i32 = arith.constant 0 : i32
    %c0_i32_0 = arith.constant 0 : i32
    %c0_i32_1 = arith.constant 0 : i32
    return %c0_i32, %c0_i32_0 : i32, i32
  }
  func.func @transform_5(%arg0: i32, %arg1: i32) -> (i32, i32) {
    %c0_i32 = arith.constant 0 : i32
    %c0_i32_0 = arith.constant 0 : i32
    %c0_i32_1 = arith.constant 0 : i32
    return %c0_i32, %c0_i32_0 : i32, i32
  }
  func.func @transform_6(%arg0: i32, %arg1: i32) -> (i32, i32) {
    %c0_i32 = arith.constant 0 : i32
    %c0_i32_0 = arith.constant 0 : i32
    %c0_i32_1 = arith.constant 0 : i32
    return %c0_i32, %c0_i32_0 : i32, i32
  }
  func.func @transform_7(%arg0: i32, %arg1: i32) -> (i32, i32) {
    %c0_i32 = arith.constant 0 : i32
    %c0_i32_0 = arith.constant 0 : i32
    return %arg0, %c0_i32 : i32, i32
  }
}

</mosaic_0001>

<llo_original>
// kernel: tpu_custom_call.1
$region0: #{tpu_custom_call.1}
  #allocation0 [shape = 'u32[]', space=smem, size = 0x4, offset = 0x4, fixed_abs, tag = 'smem constant byte address 0x4 - core index']
  #allocation1 [shape = 'u32[144,128]{1,0:T(1,128)}', space=vmem, size = 0x12000, scoped, tag = 'internal scratch']
  #allocation2 [shape = 'f32[8,32]{1,0:T(8,128)}', space=vmem, size = 0x1000, scoped, tag = 'scratch operand']
  #allocation3 [shape = 'f32[8,32]{1,0:T(8,128)}', space=vmem, size = 0x1000, scoped, tag = 'scratch operand']
  #allocation4 [shape = 'f32[8,32]{1,0:T(8,128)}', space=vmem, size = 0x1000, scoped, tag = 'scratch operand']
  #allocation5 [shape = 'f32[8,32]{1,0:T(8,128)}', space=vmem, size = 0x1000, scoped, tag = 'scratch operand']
  %s0 = inlined_call_operand.vmem [shape: s32[8,1], index: 0, kind: input, shape index: {}]
  %s1 = inlined_call_operand.hbm [shape: bf16[8,8,128], index: 1, kind: input, shape index: {}]
  %s2 = inlined_call_operand.hbm [shape: bf16[8,8,128], index: 2, kind: input, shape index: {}]
  %s3 = inlined_call_operand.hbm [shape: bf16[32,128], index: 3, kind: input, shape index: {}]
  %s4 = inlined_call_operand.vmem [shape: bf16[32,128], index: 4, kind: input, shape index: {}]
  %s5 = inlined_call_operand.hbm [shape: bf16[64,128], index: 5, kind: input, shape index: {}]
  %s6 = inlined_call_operand.vmem [shape: f32[1,128], index: 6, kind: input, shape index: {}]
  %s7 = inlined_call_operand.hbm [shape: f32[8,128], index: 7, kind: output, shape index: {}]
  %s8 = sld [smem:[#allocation0]]
  $region85: #{tpu_custom_call.1} parent=0
    _
  %s10 = ssub.s32 1, %s8
  %s11 = scalar_select 0, %s10, %s8
  $region1: #{tpu_custom_call.1} parent=0
    #allocation6 [shape = 'u8[16384]{0}', space=vmem, size = 0x4000, scoped, tag = 'input window, operand 1']
    #allocation7 [shape = 's32[2]{0}', space=sflag, size = 0x8, scoped, tag = 'scoped memory for tpu_custom_call.1']
    #allocation8 [shape = 's32[2]{0}', space=sflag, size = 0x8, scoped, tag = 'scoped memory for tpu_custom_call.1']
    #allocation9 [shape = 'u8[16384]{0}', space=vmem, size = 0x4000, scoped, tag = 'input window, operand 2']
    #allocation10 [shape = 's32[2]{0}', space=sflag, size = 0x8, scoped, tag = 'scoped memory for tpu_custom_call.1']
    #allocation11 [shape = 'u8[8192]{0}', space=vmem, size = 0x2000, scoped, tag = 'input window, operand 3, single buffered']
    #allocation12 [shape = 'u8[16384]{0}', space=vmem, size = 0x4000, scoped, tag = 'input window, operand 5, single buffered']
    #allocation13 [shape = 's32[1]{0}', space=sflag, size = 0x4, scoped, tag = 'scoped memory for tpu_custom_call.1']
    #allocation14 [shape = 'u8[4096]{0}', space=vmem, size = 0x1000, scoped, tag = 'output window, operand 0, single buffered']
    %12 = vsyncpa [#allocation7], 0
    %s13 = scalar_lea.sflag [#allocation7], 1
    %14 = vsyncpa %s13, 0
    %15 = vsyncpa [#allocation10], 0
    %s16 = scalar_lea.sflag [#allocation10], 1
    %17 = vsyncpa %s16, 0
    %18 = vsyncpa [#allocation13], 0
    %19 = vsyncpa [#allocation8], 0
    loop: start=0, step=1, limit=4
    $region2: #{tpu_custom_call.1} parent=1 // loop_pre_header
      _
    $region3: #{tpu_custom_call.1} parent=1 // loop_header
      %s21 = sphi 0, %s25
      %p22 = scmp.ge.s32.totalorder %s21, 4
      %s28 = sphi 0, %s40
      %s29 = sphi 0, %s36
      %s30 = sphi 0, %s28
      %s31 = sphi 0, %s29
      %s32 = sphi 0, %s30
      %s33 = sphi 0, %s31
      %s43 = sphi 0, %s45
      %s46 = sphi 0, %s43
      %s47 = sphi 0, %s46
      %s63 = sphi 0, %s47
      %s71 = sphi 0, %s73
      %s74 = sphi 0, %s71
      %s75 = sphi 0, %s74
      %s91 = sphi 0, %s75
      %s101 = sphi 0, %s103
      %s104 = sphi 0, %s101
      %s105 = sphi 0, %s104
      %s121 = sphi 0, %s105
      %s125 = sphi 0, %s125
      %s127 = sphi 0, %s125
      %s128 = sphi 0, %s127
      %s142 = sphi 0, %s128
      %s146 = sphi 0, %s146
      %s148 = sphi 0, %s146
      %s149 = sphi 0, %s148
      %s163 = sphi 0, %s149
      %s167 = sphi 0, %s167
      %s169 = sphi 0, %s167
      %s170 = sphi 0, %s169
      %s184 = sphi 0, %s170
      %s188 = sphi 0, %s188
      %s190 = sphi 0, %s188
      %s191 = sphi 0, %s190
      %s205 = sphi 0, %s191
      %s211 = sphi 0, %s213
      %s214 = sphi 0, %s211
      %s215 = sphi 0, %s214
      %s231 = sphi 0, %s215
    $region4: #{tpu_custom_call.1} parent=1 // loop_header_branch
      %24 = sbr.rel (%p22) target = $region8
    $region5: #{tpu_custom_call.1} parent=1 // loop_body
      %s26 = ssub.s32 %s21, 1
      %s27 = ssub.s32 %s21, 2
      %s34 = sadd.s32 1, %s29
      %p35 = scmp.ge.s32.totalorder %s34, 2
      %s36 = scalar_select %p35, 0, %s34
      %s37 = sadd.s32 1, %s28
      %s38 = scalar_select %p35, %s37, %s28
      %p39 = scmp.ge.s32.totalorder %s38, 1
      %s40 = scalar_select %p39, 0, %s38
      %s41 = ssub.s32 %s28, %s40
      %p42 = scmp.eq.s32.totalorder %s41, 0
      %s44 = sadd.s32 %s43, 1
      %s45 = scalar_select %p42, %s43, %s44
      %p48 = pneg %p42
      %p49 = scmp.eq.s32.totalorder %s21, 1
      %p50 = por %p48, %p49
      %p51 = scmp.ne.s32.totalorder %s43, %s46
      %p52 = scmp.eq.s32.totalorder %s21, 0
      %p53 = por %p51, %p52
      %p54 = scmp.ne.s32.totalorder %s43, %s46
      %p55 = scmp.eq.s32.totalorder %s26, 1
      %p56 = por %p54, %p55
      %p57 = scmp.ne.s32.totalorder %s46, %s47
      %p58 = scmp.eq.s32.totalorder %s26, 0
      %p59 = por %p57, %p58
      %p60 = scmp.ne.s32.totalorder %s46, %s47
      %p61 = scmp.eq.s32.totalorder %s27, 1
      %p62 = por %p60, %p61
      %p64 = scmp.ne.s32.totalorder %s47, %s63
      %p65 = scmp.eq.s32.totalorder %s27, 0
      %p66 = por %p64, %p65
      %s67 = ssub.s32 %s29, %s36
      %s68 = ssub.s32 %s28, %s40
      %s69 = sor.u32 %s67, %s68
      %p70 = scmp.eq.s32.totalorder %s69, 0
      %s72 = sadd.s32 %s71, 1
      %s73 = scalar_select %p70, %s71, %s72
      %p76 = pneg %p70
      %p77 = scmp.eq.s32.totalorder %s21, 1
      %p78 = por %p76, %p77
      %p79 = scmp.ne.s32.totalorder %s71, %s74
      %p80 = scmp.eq.s32.totalorder %s21, 0
      %p81 = por %p79, %p80
      %p82 = scmp.ne.s32.totalorder %s71, %s74
      %p83 = scmp.eq.s32.totalorder %s26, 1
      %p84 = por %p82, %p83
      %p85 = scmp.ne.s32.totalorder %s74, %s75
      %p86 = scmp.eq.s32.totalorder %s26, 0
      %p87 = por %p85, %p86
      %p88 = scmp.ne.s32.totalorder %s74, %s75
      %p89 = scmp.eq.s32.totalorder %s27, 1
      %p90 = por %p88, %p89
      %p92 = scmp.ne.s32.totalorder %s75, %s91
      %p93 = scmp.eq.s32.totalorder %s27, 0
      %p94 = por %p92, %p93
      %s95 = ssub.s32 1, %s29
      %s96 = ssub.s32 1, %s36
      %s97 = ssub.s32 %s95, %s96
      %s98 = ssub.s32 %s28, %s40
      %s99 = sor.u32 %s97, %s98
      %p100 = scmp.eq.s32.totalorder %s99, 0
      %s102 = sadd.s32 %s101, 1
      %s103 = scalar_select %p100, %s101, %s102
      %p106 = pneg %p100
      %p107 = scmp.eq.s32.totalorder %s21, 1
      %p108 = por %p106, %p107
      %p109 = scmp.ne.s32.totalorder %s101, %s104
      %p110 = scmp.eq.s32.totalorder %s21, 0
      %p111 = por %p109, %p110
      %p112 = scmp.ne.s32.totalorder %s101, %s104
      %p113 = scmp.eq.s32.totalorder %s26, 1
      %p114 = por %p112, %p113
      %p115 = scmp.ne.s32.totalorder %s104, %s105
      %p116 = scmp.eq.s32.totalorder %s26, 0
      %p117 = por %p115, %p116
      %p118 = scmp.ne.s32.totalorder %s104, %s105
      %p119 = scmp.eq.s32.totalorder %s27, 1
      %p120 = por %p118, %p119
      %p122 = scmp.ne.s32.totalorder %s105, %s121
      %p123 = scmp.eq.s32.totalorder %s27, 0
      %p124 = por %p122, %p123
      %s126 = sadd.s32 %s125, 1
      %p129 = scmp.eq.s32.totalorder %s21, 1
      %p130 = scmp.ne.s32.totalorder %s125, %s127
      %p131 = scmp.eq.s32.totalorder %s21, 0
      %p132 = por %p130, %p131
      %p133 = scmp.ne.s32.totalorder %s125, %s127
      %p134 = scmp.eq.s32.totalorder %s26, 1
      %p135 = por %p133, %p134
      %p136 = scmp.ne.s32.totalorder %s127, %s128
      %p137 = scmp.eq.s32.totalorder %s26, 0
      %p138 = por %p136, %p137
      %p139 = scmp.ne.s32.totalorder %s127, %s128
      %p140 = scmp.eq.s32.totalorder %s27, 1
      %p141 = por %p139, %p140
      %p143 = scmp.ne.s32.totalorder %s128, %s142
      %p144 = scmp.eq.s32.totalorder %s27, 0
      %p145 = por %p143, %p144
      %s147 = sadd.s32 %s146, 1
      %p150 = scmp.eq.s32.totalorder %s21, 1
      %p151 = scmp.ne.s32.totalorder %s146, %s148
      %p152 = scmp.eq.s32.totalorder %s21, 0
      %p153 = por %p151, %p152
      %p154 = scmp.ne.s32.totalorder %s146, %s148
      %p155 = scmp.eq.s32.totalorder %s26, 1
      %p156 = por %p154, %p155
      %p157 = scmp.ne.s32.totalorder %s148, %s149
      %p158 = scmp.eq.s32.totalorder %s26, 0
      %p159 = por %p157, %p158
      %p160 = scmp.ne.s32.totalorder %s148, %s149
      %p161 = scmp.eq.s32.totalorder %s27, 1
      %p162 = por %p160, %p161
      %p164 = scmp.ne.s32.totalorder %s149, %s163
      %p165 = scmp.eq.s32.totalorder %s27, 0
      %p166 = por %p164, %p165
      %s168 = sadd.s32 %s167, 1
      %p171 = scmp.eq.s32.totalorder %s21, 1
      %p172 = scmp.ne.s32.totalorder %s167, %s169
      %p173 = scmp.eq.s32.totalorder %s21, 0
      %p174 = por %p172, %p173
      %p175 = scmp.ne.s32.totalorder %s167, %s169
      %p176 = scmp.eq.s32.totalorder %s26, 1
      %p177 = por %p175, %p176
      %p178 = scmp.ne.s32.totalorder %s169, %s170
      %p179 = scmp.eq.s32.totalorder %s26, 0
      %p180 = por %p178, %p179
      %p181 = scmp.ne.s32.totalorder %s169, %s170
      %p182 = scmp.eq.s32.totalorder %s27, 1
      %p183 = por %p181, %p182
      %p185 = scmp.ne.s32.totalorder %s170, %s184
      %p186 = scmp.eq.s32.totalorder %s27, 0
      %p187 = por %p185, %p186
      %s189 = sadd.s32 %s188, 1
      %p192 = scmp.eq.s32.totalorder %s21, 1
      %p193 = scmp.ne.s32.totalorder %s188, %s190
      %p194 = scmp.eq.s32.totalorder %s21, 0
      %p195 = por %p193, %p194
      %p196 = scmp.ne.s32.totalorder %s188, %s190
      %p197 = scmp.eq.s32.totalorder %s26, 1
      %p198 = por %p196, %p197
      %p199 = scmp.ne.s32.totalorder %s190, %s191
      %p200 = scmp.eq.s32.totalorder %s26, 0
      %p201 = por %p199, %p200
      %p202 = scmp.ne.s32.totalorder %s190, %s191
      %p203 = scmp.eq.s32.totalorder %s27, 1
      %p204 = por %p202, %p203
      %p206 = scmp.ne.s32.totalorder %s191, %s205
      %p207 = scmp.eq.s32.totalorder %s27, 0
      %p208 = por %p206, %p207
      %s209 = ssub.s32 %s28, %s40
      %p210 = scmp.eq.s32.totalorder %s209, 0
      %s212 = sadd.s32 %s211, 1
      %s213 = scalar_select %p210, %s211, %s212
      %p216 = pneg %p210
      %p217 = scmp.eq.s32.totalorder %s21, 1
      %p218 = por %p216, %p217
      %p219 = scmp.ne.s32.totalorder %s211, %s214
      %p220 = scmp.eq.s32.totalorder %s21, 0
      %p221 = por %p219, %p220
      %p222 = scmp.ne.s32.totalorder %s211, %s214
      %p223 = scmp.eq.s32.totalorder %s26, 1
      %p224 = por %p222, %p223
      %p225 = scmp.ne.s32.totalorder %s214, %s215
      %p226 = scmp.eq.s32.totalorder %s26, 0
      %p227 = por %p225, %p226
      %p228 = scmp.ne.s32.totalorder %s214, %s215
      %p229 = scmp.eq.s32.totalorder %s27, 1
      %p230 = por %p228, %p229
      %p232 = scmp.ne.s32.totalorder %s215, %s231
      %p233 = scmp.eq.s32.totalorder %s27, 0
      %p234 = por %p232, %p233
      %p235 = scmp.le.s32.totalorder 1, %s21
      %p236 = scmp.lt.s32.totalorder %s21, 3
      %p237 = pnand %p235, %p236
      %p238 = pneg %p237
      // Predicated region
      $region9: #{tpu_custom_call.1} parent=5 // pred_check
        _
      $region10: #{tpu_custom_call.1} parent=5 // pred_check_branch
        %240 = sbr.rel (%p237) target = $region12
      $region11: #{tpu_custom_call.1} parent=5 // pred_region
        %s241 = ssub.s32 %s21, 1
        // Predicated region
        $region13: #{tpu_custom_call.1} parent=11 // pred_check
          %p242 = pneg %p59
        $region14: #{tpu_custom_call.1} parent=11 // pred_check_branch
          %244 = sbr.rel (%p242) target = $region16
        $region15: #{tpu_custom_call.1} parent=11 // pred_region
          %p245 = scmp.lt.s32.totalorder %s30, 0
          %s246 = scalar_select %p245, %s30, 0
          %s247 = smul.addr %s246, 8
          %s248 = scalar_lea.vmem %s0, %s247
        $region16: #{tpu_custom_call.1} parent=11 // pred_fallthru
          _
        // Predicated region
        $region17: #{tpu_custom_call.1} parent=11 // pred_check
          %p249 = pneg %p138
        $region18: #{tpu_custom_call.1} parent=11 // pred_check_branch
          %251 = sbr.rel (%p249) target = $region20
        $region19: #{tpu_custom_call.1} parent=11 // pred_region
          %s253 = ssub.s32 256, 256
          %254 = vsyncadd [#allocation10], %s253
          %s255 = sshll.u32 [#allocation11], 4
          %s256 = int_to_ptr.vmem [resolvable:$true] %s255
          %261 = dma.hbm_to_vmem [thread:$0]  %s3, 256, %s256, [#allocation10], 64, 64, 4
        $region20: #{tpu_custom_call.1} parent=11 // pred_fallthru
          _
        // Predicated region
        $region21: #{tpu_custom_call.1} parent=11 // pred_check
          %p262 = pneg %p159
        $region22: #{tpu_custom_call.1} parent=11 // pred_check_branch
          %264 = sbr.rel (%p262) target = $region24
        $region23: #{tpu_custom_call.1} parent=11 // pred_region
          _
        $region24: #{tpu_custom_call.1} parent=11 // pred_fallthru
          _
        // Predicated region
        $region25: #{tpu_custom_call.1} parent=11 // pred_check
          %p265 = pneg %p180
        $region26: #{tpu_custom_call.1} parent=11 // pred_check_branch
          %267 = sbr.rel (%p265) target = $region28
        $region27: #{tpu_custom_call.1} parent=11 // pred_region
          %s269 = ssub.s32 512, 512
          %270 = vsyncadd [#allocation13], %s269
          %s271 = sshll.u32 [#allocation12], 4
          %s272 = int_to_ptr.vmem [resolvable:$true] %s271
          %277 = dma.hbm_to_vmem [thread:$0]  %s5, 512, %s272, [#allocation13], 64, 64, 4
        $region28: #{tpu_custom_call.1} parent=11 // pred_fallthru
          _
        // Predicated region
        $region29: #{tpu_custom_call.1} parent=11 // pred_check
          %p278 = pneg %p201
        $region30: #{tpu_custom_call.1} parent=11 // pred_check_branch
          %280 = sbr.rel (%p278) target = $region32
        $region31: #{tpu_custom_call.1} parent=11 // pred_region
          _
        $region32: #{tpu_custom_call.1} parent=11 // pred_fallthru
          _
      $region12: #{tpu_custom_call.1} parent=5 // pred_fallthru
        _
      %p281 = scmp.lt.s32.totalorder %s21, 2
      // Predicated region
      $region33: #{tpu_custom_call.1} parent=5 // pred_check
        %p282 = pneg %p281
      $region34: #{tpu_custom_call.1} parent=5 // pred_check_branch
        %284 = sbr.rel (%p282) target = $region36
      $region35: #{tpu_custom_call.1} parent=5 // pred_region
        // Predicated region
        $region37: #{tpu_custom_call.1} parent=35 // pred_check
          %p285 = pneg %p81
        $region38: #{tpu_custom_call.1} parent=35 // pred_check_branch
          %287 = sbr.rel (%p285) target = $region40
        $region39: #{tpu_custom_call.1} parent=35 // pred_region
          %s288 = sand.u32 %s71, 1
          %s289 = scalar_lea.sflag [#allocation7], %s288
          %s290 = sand.u32 %s71, 1
          %s291 = smul.addr %s290, 16
          %s292 = scalar_lea.vmem [#allocation6], %s291
          %s293 = smul.u32 4, %s29
          %s295 = ssub.s32 256, 256
          %296 = vsyncadd %s289, %s295
          %s297 = sadd.s32 %s28, %s293
          %s298 = smul.addr %s297, 64
          %s299 = scalar_lea.hbm %s1, %s298
          %s300 = sshll.u32 %s292, 4
          %s301 = int_to_ptr.vmem [resolvable:$true] %s300
          %306 = dma.hbm_to_vmem [thread:$0]  %s299, 256, %s301, %s289, 64, 64, 4
        $region40: #{tpu_custom_call.1} parent=35 // pred_fallthru
          _
        // Predicated region
        $region41: #{tpu_custom_call.1} parent=35 // pred_check
          %p307 = pneg %p111
        $region42: #{tpu_custom_call.1} parent=35 // pred_check_branch
          %309 = sbr.rel (%p307) target = $region44
        $region43: #{tpu_custom_call.1} parent=35 // pred_region
          %s310 = sand.u32 %s21, 1
          %s311 = scalar_lea.sflag [#allocation10], %s310
          %s312 = sand.u32 %s101, 1
          %s313 = smul.addr %s312, 16
          %s314 = scalar_lea.vmem [#allocation9], %s313
          %s315 = ssub.s32 1, %s29
          %s316 = smul.u32 4, %s315
          %s318 = ssub.s32 256, 256
          %319 = vsyncadd %s311, %s318
          %s320 = sadd.s32 %s28, %s316
          %s321 = smul.addr %s320, 64
          %s322 = scalar_lea.hbm %s2, %s321
          %s323 = sshll.u32 %s314, 4
          %s324 = int_to_ptr.vmem [resolvable:$true] %s323
          %329 = dma.hbm_to_vmem [thread:$0]  %s322, 256, %s324, %s311, 64, 64, 4
        $region44: #{tpu_custom_call.1} parent=35 // pred_fallthru
          _
      $region36: #{tpu_custom_call.1} parent=5 // pred_fallthru
        _
      %p330 = scmp.le.s32.totalorder 1, %s21
      %p331 = scmp.lt.s32.totalorder %s21, 3
      %p332 = pnand %p330, %p331
      %p333 = pneg %p332
      // Predicated region
      $region45: #{tpu_custom_call.1} parent=5 // pred_check
        _
      $region46: #{tpu_custom_call.1} parent=5 // pred_check_branch
        %335 = sbr.rel (%p332) target = $region48
      $region47: #{tpu_custom_call.1} parent=5 // pred_region
        %s336 = ssub.s32 %s21, 1
        %s337 = sand.u32 %s74, 1
        %s338 = scalar_lea.sflag [#allocation7], %s337
        %s339 = sand.u32 %s74, 1
        %s340 = smul.addr %s339, 16
        %s341 = scalar_lea.vmem [#allocation6], %s340
        // Predicated region
        $region49: #{tpu_custom_call.1} parent=47 // pred_check
          %p342 = pneg %p87
        $region50: #{tpu_custom_call.1} parent=47 // pred_check_branch
          %344 = sbr.rel (%p342) target = $region52
        $region51: #{tpu_custom_call.1} parent=47 // pred_region
          %345 = dma.done %s338, 256
        $region52: #{tpu_custom_call.1} parent=47 // pred_fallthru
          _
        %s346 = sand.u32 %s26, 1
        %s347 = scalar_lea.sflag [#allocation10], %s346
        %s348 = sand.u32 %s104, 1
        %s349 = smul.addr %s348, 16
        %s350 = scalar_lea.vmem [#allocation9], %s349
        // Predicated region
        $region53: #{tpu_custom_call.1} parent=47 // pred_check
          %p351 = pneg %p117
        $region54: #{tpu_custom_call.1} parent=47 // pred_check_branch
          %353 = sbr.rel (%p351) target = $region56
        $region55: #{tpu_custom_call.1} parent=47 // pred_region
          %354 = dma.done %s347, 256
        $region56: #{tpu_custom_call.1} parent=47 // pred_fallthru
          _
        // Predicated region
        $region57: #{tpu_custom_call.1} parent=47 // pred_check
          %p355 = pneg %p138
        $region58: #{tpu_custom_call.1} parent=47 // pred_check_branch
          %357 = sbr.rel (%p355) target = $region60
        $region59: #{tpu_custom_call.1} parent=47 // pred_region
          %358 = dma.done [#allocation10], 256
        $region60: #{tpu_custom_call.1} parent=47 // pred_fallthru
          _
        // Predicated region
        $region61: #{tpu_custom_call.1} parent=47 // pred_check
          %p359 = pneg %p180
        $region62: #{tpu_custom_call.1} parent=47 // pred_check_branch
          %361 = sbr.rel (%p359) target = $region64
        $region63: #{tpu_custom_call.1} parent=47 // pred_region
          %362 = dma.done [#allocation13], 512
        $region64: #{tpu_custom_call.1} parent=47 // pred_fallthru
          _
        %p363 = scmp.lt.s32.totalorder %s30, 0
        %s364 = scalar_select %p363, %s30, 0
        %s365 = smul.addr %s364, 8
        %s366 = scalar_lea.vmem %s0, %s365
        %p367 = pneg %p59
        %p368 = pneg %p56
        %s369 = sand.u32 %s74, 1
        %s370 = scalar_lea.sflag [#allocation7], %s369
        %s371 = sand.u32 %s74, 1
        %s372 = smul.addr %s371, 16
        %s373 = scalar_lea.vmem [#allocation6], %s372
        %p374 = pneg %p87
        %p375 = pneg %p84
        %s376 = sand.u32 %s26, 1
        %s377 = scalar_lea.sflag [#allocation10], %s376
        %s378 = sand.u32 %s104, 1
        %s379 = smul.addr %s378, 16
        %s380 = scalar_lea.vmem [#allocation9], %s379
        %p381 = pneg %p117
        %p382 = pneg %p114
        %p383 = pneg %p138
        %p384 = pneg %p135
        %p385 = pneg %p159
        %p386 = pneg %p156
        %p387 = pneg %p180
        %p388 = pneg %p177
        %p389 = pneg %p201
        %p390 = pneg %p198
        %p391 = pneg %p227
        %p392 = pneg %p224
        %p393 = scmp.lt.s32.totalorder %s30, 0
        %s394 = scalar_select %p393, %s30, 0
        %s395 = smul.addr %s394, 8
        %s396 = scalar_lea.vmem %s0, %s395
        %s397 = smul.u32 4, %s31
        %s398 = ssub.s32 1, %s31
        %s399 = smul.u32 4, %s398
        %p401 = scmp.eq.s32.totalorder %s31, 0
        // Predicated region
        $region65: #{tpu_custom_call.1} parent=47 // pred_check
          %p402 = pneg %p401
        $region66: #{tpu_custom_call.1} parent=47 // pred_check_branch
          %404 = sbr.rel (%p402) target = $region68
        $region67: #{tpu_custom_call.1} parent=47 // pred_region
          %vm405 = vcmask 261120
          %406 = vst.msk [vmem:[#allocation2] sm:$0xff] %vm405, 0.0
          %407 = vst.msk [vmem:[#allocation3] sm:$0xff] %vm405, 0.0
          %408 = vst.msk [vmem:[#allocation4] sm:$0xff] %vm405, 0.0
          %409 = vst.msk [vmem:[#allocation5] sm:$0xff] %vm405, 0.0
        $region68: #{tpu_custom_call.1} parent=47 // pred_fallthru
          _
        %v410 = vld [vmem:[%s396] sm:$0xff]
        %s411 = smul.u32 %s31, 4
        %v412 = vld [vmem:[#allocation2] sm:$0xff]
        %v413 = vld [vmem:[#allocation3] sm:$0xff]
        %v414 = vld [vmem:[#allocation4] sm:$0xff]
        %v415 = vld [vmem:[#allocation5] sm:$0xff]
        %v416 = vld [vmem:[%s341] sm:$0xf]
        %v417 = vunpack.c.l.bf16 %v416
        %v418 = vpack.c.bf16 %v412, %v412
        %v419 = vld [vmem:[#allocation11] sm:$0xf]
        %v420 = vld [vmem:[#allocation11 + $0x4] sm:$0xf]
        %v421 = vld [vmem:[#allocation11 + $0x8] sm:$0xf]
        %v422 = vld [vmem:[#allocation11 + $0xc] sm:$0xf]
        %v427 = vunpack.c.l.b16 %v419
        %v428 = vunpack.c.l.b16 %v420
        %v429 = vunpack.c.l.b16 %v421
        %v430 = vunpack.c.l.b16 %v422
        %v431 = vpack.c.b16 %v428, %v427
        %v432 = vpack.c.b16 %v430, %v429
        %vm435 = vcmask 261120
        %v437 = vsel %vm435, %v418, 0
        %439 = vmatprep.subr.bf16.mxu0 0
        %440 = vmatpush1.bf16.msra.mxu0 0
        %441 = vmatprep.subr.bf16.mxu0 0
        %442 = vmatpush1.bf16.msra.mxu0 0
        %443 = vmatprep.subr.bf16.mxu0 0
        %444 = vmatpush1.bf16.msra.mxu0 0
        %445 = vmatprep.subr.bf16.mxu0 0
        %446 = vmatpush1.bf16.msra.mxu0 0
        %447 = vmatprep.subr.bf16.mxu0 0
        %448 = vmatpush1.bf16.msra.mxu0 0
        %449 = vmatprep.subr.bf16.mxu0 0
        %450 = vmatpush1.bf16.msra.mxu0 0
        %451 = vmatprep.subr.bf16.mxu0 0
        %452 = vmatpush1.bf16.msra.mxu0 %v432
        %453 = vmatprep.subr.bf16.mxu0 0
        %454 = vmatpush1.bf16.msra.mxu0 %v431
        %455 = vmatprep.subr.bf16.mxu0 0
        %456 = vmatpush2.bf16.msra.mxu0 0
        %457 = vmatprep.subr.bf16.mxu0 0
        %458 = vmatpush2.bf16.msra.mxu0 0
        %459 = vmatprep.subr.bf16.mxu0 0
        %460 = vmatpush2.bf16.msra.mxu0 0
        %461 = vmatprep.subr.bf16.mxu0 0
        %462 = vmatpush2.bf16.msra.mxu0 0
        %463 = vmatprep.subr.bf16.mxu0 0
        %464 = vmatpush2.bf16.msra.mxu0 0
        %465 = vmatprep.subr.bf16.mxu0 0
        %466 = vmatpush2.bf16.msra.mxu0 0
        %467 = vmatprep.subr.bf16.mxu0 0
        %468 = vmatpush2.bf16.msra.mxu0 0
        %469 = vmatprep.subr.bf16.mxu0 0
        %470 = vmatpush2.bf16.msra.mxu0 0
        %471 = vmatprep.mubr.bf16.mxu0 0
        %472 = vmatmul.mubr.bf16.gmra.mxu0 %v437
        %v473 = vpop.f32.mrf.mxu0
        %v474 = vadd.f32 0.0, %v473
        %v475 = vpop.f32.mrf.mxu0
        %v476 = vpop.f32.mrf.mxu0
        %v477 = vpop.f32.mrf.mxu0
        %478 = vdwg.mxu0
        %v479 = vadd.f32 %v417, %v474
        %v480 = vxor.u32 %v479, 2147483648
        %v481 = vmul.f32 %v480, 1.442695
        %v482 = vpow.pop %v481
        %v483 = vadd.f32 %v482, 1.0
        %v484 = vrcp.pop %v483
        %v485 = vmul.f32 1.0, %v484
        %v486 = vtanh.pop %v479
        %488 = vrot.lane.b32.xlu0 %v413, 32
        %v489 = vpop.permute.xlu0 %488
        %v491 = vmul.f32 %v485, %v489
        %493 = vrot.lane.b32.xlu0 %v486, 64
        %v494 = vpop.permute.xlu0 %493
        %v496 = vmul.f32 %v485, %v494
        %498 = vrot.lane.b32.xlu0 %v496, 32
        %v499 = vpop.permute.xlu0 %498
        %v501 = vadd.f32 %v491, %v499
        %v502 = vtanh.pop %v501
        %504 = vrot.lane.b32.xlu0 %v502, 64
        %v505 = vpop.permute.xlu0 %504
        %v507 = vmul.f32 %v485, %v505
        %v508 = vstv %s411
        %vm509 = vcmp.lt.s32.totalorder %v508, %v410
        %v510 = vsel %vm509, 1, 0
        %511 = vset.pattern.permute.xlu0 0
        %512 = vperm.xlu0 %511, %v510
        %v513 = vpop.permute.xlu0 %512
        %vm514 = vcmp.eq.s32.totalorder %v513, 1
        %516 = vrot.lane.b32.xlu0 %v412, 96
        %v517 = vpop.permute.xlu0 %516
        %v519 = vsel %vm514, %v507, %v517
        %v520 = vsel %vm514, %v501, %v489
        %s521 = ssub.s32 7, %s411
        %s522 = scalar_lea.vmem %s350, 12 [#allocation9]
        %v523 = vld [vmem:[%s522] sm:$0xf]
        %v524 = vunpack.c.l.bf16 %v523
        %v525 = vpack.c.bf16 %v414, %v414
        %v526 = vld [vmem:[%s4] sm:$0xf]
        %v527 = vld [vmem:[%s4 + $0x4] sm:$0xf]
        %v528 = vld [vmem:[%s4 + $0x8] sm:$0xf]
        %v529 = vld [vmem:[%s4 + $0xc] sm:$0xf]
        %v534 = vunpack.c.l.b16 %v526
        %v535 = vunpack.c.l.b16 %v527
        %v536 = vunpack.c.l.b16 %v528
        %v537 = vunpack.c.l.b16 %v529
        %v538 = vpack.c.b16 %v535, %v534
        %v539 = vpack.c.b16 %v537, %v536
        %v543 = vsel %vm435, %v525, 0
        %545 = vmatprep.subr.bf16.mxu0 0
        %546 = vmatpush1.bf16.msra.mxu0 0
        %547 = vmatprep.subr.bf16.mxu0 0
        %548 = vmatpush1.bf16.msra.mxu0 0
        %549 = vmatprep.subr.bf16.mxu0 0
        %550 = vmatpush1.bf16.msra.mxu0 0
        %551 = vmatprep.subr.bf16.mxu0 0
        %552 = vmatpush1.bf16.msra.mxu0 0
        %553 = vmatprep.subr.bf16.mxu0 0
        %554 = vmatpush1.bf16.msra.mxu0 0
        %555 = vmatprep.subr.bf16.mxu0 0
        %556 = vmatpush1.bf16.msra.mxu0 0
        %557 = vmatprep.subr.bf16.mxu0 0
        %558 = vmatpush1.bf16.msra.mxu0 %v539
        %559 = vmatprep.subr.bf16.mxu0 0
        %560 = vmatpush1.bf16.msra.mxu0 %v538
        %561 = vmatprep.subr.bf16.mxu0 0
        %562 = vmatpush2.bf16.msra.mxu0 0
        %563 = vmatprep.subr.bf16.mxu0 0
        %564 = vmatpush2.bf16.msra.mxu0 0
        %565 = vmatprep.subr.bf16.mxu0 0
        %566 = vmatpush2.bf16.msra.mxu0 0
        %567 = vmatprep.subr.bf16.mxu0 0
        %568 = vmatpush2.bf16.msra.mxu0 0
        %569 = vmatprep.subr.bf16.mxu0 0
        %570 = vmatpush2.bf16.msra.mxu0 0
        %571 = vmatprep.subr.bf16.mxu0 0
        %572 = vmatpush2.bf16.msra.mxu0 0
        %573 = vmatprep.subr.bf16.mxu0 0
        %574 = vmatpush2.bf16.msra.mxu0 0
        %575 = vmatprep.subr.bf16.mxu0 0
        %576 = vmatpush2.bf16.msra.mxu0 0
        %577 = vmatprep.mubr.bf16.mxu0 0
        %578 = vmatmul.mubr.bf16.gmra.mxu0 %v543
        %v579 = vpop.f32.mrf.mxu0
        %v580 = vadd.f32 0.0, %v579
        %v581 = vpop.f32.mrf.mxu0
        %v582 = vpop.f32.mrf.mxu0
        %v583 = vpop.f32.mrf.mxu0
        %584 = vdwg.mxu0
        %v585 = vadd.f32 %v524, %v580
        %v586 = vxor.u32 %v585, 2147483648
        %v587 = vmul.f32 %v586, 1.442695
        %v588 = vpow.pop %v587
        %v589 = vadd.f32 %v588, 1.0
        %v590 = vrcp.pop %v589
        %v591 = vmul.f32 1.0, %v590
        %v592 = vtanh.pop %v585
        %594 = vrot.lane.b32.xlu0 %v415, 32
        %v595 = vpop.permute.xlu0 %594
        %v597 = vmul.f32 %v591, %v595
        %599 = vrot.lane.b32.xlu0 %v592, 64
        %v600 = vpop.permute.xlu0 %599
        %v602 = vmul.f32 %v591, %v600
        %604 = vrot.lane.b32.xlu0 %v602, 32
        %v605 = vpop.permute.xlu0 %604
        %v607 = vadd.f32 %v597, %v605
        %v608 = vtanh.pop %v607
        %610 = vrot.lane.b32.xlu0 %v608, 64
        %v611 = vpop.permute.xlu0 %610
        %v613 = vmul.f32 %v591, %v611
        %v614 = vstv %s521
        %vm615 = vcmp.lt.s32.totalorder %v614, %v410
        %v616 = vsel %vm615, 1, 0
        %617 = vset.pattern.permute.xlu0 0
        %618 = vperm.xlu0 %617, %v616
        %v619 = vpop.permute.xlu0 %618
        %vm620 = vcmp.eq.s32.totalorder %v619, 1
        %622 = vrot.lane.b32.xlu0 %v414, 96
        %v623 = vpop.permute.xlu0 %622
        %v625 = vsel %vm620, %v613, %v623
        %v626 = vsel %vm620, %v607, %v595
        %s627 = sadd.s32 %s411, 1
        %s628 = scalar_lea.vmem %s341, 4 [#allocation6]
        %v629 = vld [vmem:[%s628] sm:$0xf]
        %v630 = vunpack.c.l.bf16 %v629
        %v631 = vpack.c.bf16 %v519, %v519
        %633 = vrot.lane.b32.xlu0 %v631, 32
        %v634 = vpop.permute.xlu0 %633
        %v636 = vsel %vm435, %v634, 0
        %638 = vmatprep.subr.bf16.mxu0 0
        %639 = vmatpush1.bf16.msra.mxu0 0
        %640 = vmatprep.subr.bf16.mxu0 0
        %641 = vmatpush1.bf16.msra.mxu0 0
        %642 = vmatprep.subr.bf16.mxu0 0
        %643 = vmatpush1.bf16.msra.mxu0 0
        %644 = vmatprep.subr.bf16.mxu0 0
        %645 = vmatpush1.bf16.msra.mxu0 0
        %646 = vmatprep.subr.bf16.mxu0 0
        %647 = vmatpush1.bf16.msra.mxu0 0
        %648 = vmatprep.subr.bf16.mxu0 0
        %649 = vmatpush1.bf16.msra.mxu0 0
        %650 = vmatprep.subr.bf16.mxu0 0
        %651 = vmatpush1.bf16.msra.mxu0 %v432
        %652 = vmatprep.subr.bf16.mxu0 0
        %653 = vmatpush1.bf16.msra.mxu0 %v431
        %654 = vmatprep.subr.bf16.mxu0 0
        %655 = vmatpush2.bf16.msra.mxu0 0
        %656 = vmatprep.subr.bf16.mxu0 0
        %657 = vmatpush2.bf16.msra.mxu0 0
        %658 = vmatprep.subr.bf16.mxu0 0
        %659 = vmatpush2.bf16.msra.mxu0 0
        %660 = vmatprep.subr.bf16.mxu0 0
        %661 = vmatpush2.bf16.msra.mxu0 0
        %662 = vmatprep.subr.bf16.mxu0 0
        %663 = vmatpush2.bf16.msra.mxu0 0
        %664 = vmatprep.subr.bf16.mxu0 0
        %665 = vmatpush2.bf16.msra.mxu0 0
        %666 = vmatprep.subr.bf16.mxu0 0
        %667 = vmatpush2.bf16.msra.mxu0 0
        %668 = vmatprep.subr.bf16.mxu0 0
        %669 = vmatpush2.bf16.msra.mxu0 0
        %670 = vmatprep.mubr.bf16.mxu0 0
        %671 = vmatmul.mubr.bf16.gmra.mxu0 %v636
        %v672 = vpop.f32.mrf.mxu0
        %v673 = vadd.f32 0.0, %v672
        %v674 = vpop.f32.mrf.mxu0
        %v675 = vpop.f32.mrf.mxu0
        %v676 = vpop.f32.mrf.mxu0
        %677 = vdwg.mxu0
        %v678 = vadd.f32 %v630, %v673
        %v679 = vxor.u32 %v678, 2147483648
        %v680 = vmul.f32 %v679, 1.442695
        %v681 = vpow.pop %v680
        %v682 = vadd.f32 %v681, 1.0
        %v683 = vrcp.pop %v682
        %v684 = vmul.f32 1.0, %v683
        %v685 = vtanh.pop %v678
        %v686 = vmul.f32 %v684, %v520
        %688 = vrot.lane.b32.xlu0 %v685, 64
        %v689 = vpop.permute.xlu0 %688
        %v691 = vmul.f32 %v684, %v689
        %693 = vrot.lane.b32.xlu0 %v691, 32
        %v694 = vpop.permute.xlu0 %693
        %v696 = vadd.f32 %v686, %v694
        %v697 = vtanh.pop %v696
        %699 = vrot.lane.b32.xlu0 %v697, 64
        %v700 = vpop.permute.xlu0 %699
        %v702 = vmul.f32 %v684, %v700
        %v703 = vstv %s627
        %vm704 = vcmp.lt.s32.totalorder %v703, %v410
        %v705 = vsel %vm704, 1, 0
        %706 = vset.pattern.permute.xlu0 0
        %707 = vperm.xlu0 %706, %v705
        %v708 = vpop.permute.xlu0 %707
        %vm709 = vcmp.eq.s32.totalorder %v708, 1
        %v710 = vsel %vm709, %v702, %v519
        %v711 = vsel %vm709, %v696, %v520
        %s712 = ssub.s32 6, %s411
        %s713 = scalar_lea.vmem %s350, 8 [#allocation9]
        %v714 = vld [vmem:[%s713] sm:$0xf]
        %v715 = vunpack.c.l.bf16 %v714
        %v716 = vpack.c.bf16 %v625, %v625
        %718 = vrot.lane.b32.xlu0 %v716, 32
        %v719 = vpop.permute.xlu0 %718
        %v721 = vsel %vm435, %v719, 0
        %723 = vmatprep.subr.bf16.mxu0 0
        %724 = vmatpush1.bf16.msra.mxu0 0
        %725 = vmatprep.subr.bf16.mxu0 0
        %726 = vmatpush1.bf16.msra.mxu0 0
        %727 = vmatprep.subr.bf16.mxu0 0
        %728 = vmatpush1.bf16.msra.mxu0 0
        %729 = vmatprep.subr.bf16.mxu0 0
        %730 = vmatpush1.bf16.msra.mxu0 0
        %731 = vmatprep.subr.bf16.mxu0 0
        %732 = vmatpush1.bf16.msra.mxu0 0
        %733 = vmatprep.subr.bf16.mxu0 0
        %734 = vmatpush1.bf16.msra.mxu0 0
        %735 = vmatprep.subr.bf16.mxu0 0
        %736 = vmatpush1.bf16.msra.mxu0 %v539
        %737 = vmatprep.subr.bf16.mxu0 0
        %738 = vmatpush1.bf16.msra.mxu0 %v538
        %739 = vmatprep.subr.bf16.mxu0 0
        %740 = vmatpush2.bf16.msra.mxu0 0
        %741 = vmatprep.subr.bf16.mxu0 0
        %742 = vmatpush2.bf16.msra.mxu0 0
        %743 = vmatprep.subr.bf16.mxu0 0
        %744 = vmatpush2.bf16.msra.mxu0 0
        %745 = vmatprep.subr.bf16.mxu0 0
        %746 = vmatpush2.bf16.msra.mxu0 0
        %747 = vmatprep.subr.bf16.mxu0 0
        %748 = vmatpush2.bf16.msra.mxu0 0
        %749 = vmatprep.subr.bf16.mxu0 0
        %750 = vmatpush2.bf16.msra.mxu0 0
        %751 = vmatprep.subr.bf16.mxu0 0
        %752 = vmatpush2.bf16.msra.mxu0 0
        %753 = vmatprep.subr.bf16.mxu0 0
        %754 = vmatpush2.bf16.msra.mxu0 0
        %755 = vmatprep.mubr.bf16.mxu0 0
        %756 = vmatmul.mubr.bf16.gmra.mxu0 %v721
        %v757 = vpop.f32.mrf.mxu0
        %v758 = vadd.f32 0.0, %v757
        %v759 = vpop.f32.mrf.mxu0
        %v760 = vpop.f32.mrf.mxu0
        %v761 = vpop.f32.mrf.mxu0
        %762 = vdwg.mxu0
        %v763 = vadd.f32 %v715, %v758
        %v764 = vxor.u32 %v763, 2147483648
        %v765 = vmul.f32 %v764, 1.442695
        %v766 = vpow.pop %v765
        %v767 = vadd.f32 %v766, 1.0
        %v768 = vrcp.pop %v767
        %v769 = vmul.f32 1.0, %v768
        %v770 = vtanh.pop %v763
        %v771 = vmul.f32 %v769, %v626
        %773 = vrot.lane.b32.xlu0 %v770, 64
        %v774 = vpop.permute.xlu0 %773
        %v776 = vmul.f32 %v769, %v774
        %778 = vrot.lane.b32.xlu0 %v776, 32
        %v779 = vpop.permute.xlu0 %778
        %v781 = vadd.f32 %v771, %v779
        %v782 = vtanh.pop %v781
        %784 = vrot.lane.b32.xlu0 %v782, 64
        %v785 = vpop.permute.xlu0 %784
        %v787 = vmul.f32 %v769, %v785
        %v788 = vstv %s712
        %vm789 = vcmp.lt.s32.totalorder %v788, %v410
        %v790 = vsel %vm789, 1, 0
        %791 = vset.pattern.permute.xlu0 0
        %792 = vperm.xlu0 %791, %v790
        %v793 = vpop.permute.xlu0 %792
        %vm794 = vcmp.eq.s32.totalorder %v793, 1
        %v795 = vsel %vm794, %v787, %v625
        %v796 = vsel %vm794, %v781, %v626
        %s797 = sadd.s32 %s411, 2
        %s798 = scalar_lea.vmem %s341, 8 [#allocation6]
        %v799 = vld [vmem:[%s798] sm:$0xf]
        %v800 = vunpack.c.l.bf16 %v799
        %v801 = vpack.c.bf16 %v710, %v710
        %803 = vrot.lane.b32.xlu0 %v801, 32
        %v804 = vpop.permute.xlu0 %803
        %v806 = vsel %vm435, %v804, 0
        %808 = vmatprep.subr.bf16.mxu0 0
        %809 = vmatpush1.bf16.msra.mxu0 0
        %810 = vmatprep.subr.bf16.mxu0 0
        %811 = vmatpush1.bf16.msra.mxu0 0
        %812 = vmatprep.subr.bf16.mxu0 0
        %813 = vmatpush1.bf16.msra.mxu0 0
        %814 = vmatprep.subr.bf16.mxu0 0
        %815 = vmatpush1.bf16.msra.mxu0 0
        %816 = vmatprep.subr.bf16.mxu0 0
        %817 = vmatpush1.bf16.msra.mxu0 0
        %818 = vmatprep.subr.bf16.mxu0 0
        %819 = vmatpush1.bf16.msra.mxu0 0
        %820 = vmatprep.subr.bf16.mxu0 0
        %821 = vmatpush1.bf16.msra.mxu0 %v432
        %822 = vmatprep.subr.bf16.mxu0 0
        %823 = vmatpush1.bf16.msra.mxu0 %v431
        %824 = vmatprep.subr.bf16.mxu0 0
        %825 = vmatpush2.bf16.msra.mxu0 0
        %826 = vmatprep.subr.bf16.mxu0 0
        %827 = vmatpush2.bf16.msra.mxu0 0
        %828 = vmatprep.subr.bf16.mxu0 0
        %829 = vmatpush2.bf16.msra.mxu0 0
        %830 = vmatprep.subr.bf16.mxu0 0
        %831 = vmatpush2.bf16.msra.mxu0 0
        %832 = vmatprep.subr.bf16.mxu0 0
        %833 = vmatpush2.bf16.msra.mxu0 0
        %834 = vmatprep.subr.bf16.mxu0 0
        %835 = vmatpush2.bf16.msra.mxu0 0
        %836 = vmatprep.subr.bf16.mxu0 0
        %837 = vmatpush2.bf16.msra.mxu0 0
        %838 = vmatprep.subr.bf16.mxu0 0
        %839 = vmatpush2.bf16.msra.mxu0 0
        %840 = vmatprep.mubr.bf16.mxu0 0
        %841 = vmatmul.mubr.bf16.gmra.mxu0 %v806
        %v842 = vpop.f32.mrf.mxu0
        %v843 = vadd.f32 0.0, %v842
        %v844 = vpop.f32.mrf.mxu0
        %v845 = vpop.f32.mrf.mxu0
        %v846 = vpop.f32.mrf.mxu0
        %847 = vdwg.mxu0
        %v848 = vadd.f32 %v800, %v843
        %v849 = vxor.u32 %v848, 2147483648
        %v850 = vmul.f32 %v849, 1.442695
        %v851 = vpow.pop %v850
        %v852 = vadd.f32 %v851, 1.0
        %v853 = vrcp.pop %v852
        %v854 = vmul.f32 1.0, %v853
        %v855 = vtanh.pop %v848
        %v856 = vmul.f32 %v854, %v711
        %858 = vrot.lane.b32.xlu0 %v855, 64
        %v859 = vpop.permute.xlu0 %858
        %v861 = vmul.f32 %v854, %v859
        %863 = vrot.lane.b32.xlu0 %v861, 32
        %v864 = vpop.permute.xlu0 %863
        %v866 = vadd.f32 %v856, %v864
        %v867 = vtanh.pop %v866
        %869 = vrot.lane.b32.xlu0 %v867, 64
        %v870 = vpop.permute.xlu0 %869
        %v872 = vmul.f32 %v854, %v870
        %v873 = vstv %s797
        %vm874 = vcmp.lt.s32.totalorder %v873, %v410
        %v875 = vsel %vm874, 1, 0
        %876 = vset.pattern.permute.xlu0 0
        %877 = vperm.xlu0 %876, %v875
        %v878 = vpop.permute.xlu0 %877
        %vm879 = vcmp.eq.s32.totalorder %v878, 1
        %v880 = vsel %vm879, %v872, %v710
        %v881 = vsel %vm879, %v866, %v711
        %s882 = ssub.s32 5, %s411
        %s883 = scalar_lea.vmem %s350, 4 [#allocation9]
        %v884 = vld [vmem:[%s883] sm:$0xf]
        %v885 = vunpack.c.l.bf16 %v884
        %v886 = vpack.c.bf16 %v795, %v795
        %888 = vrot.lane.b32.xlu0 %v886, 32
        %v889 = vpop.permute.xlu0 %888
        %v891 = vsel %vm435, %v889, 0
        %893 = vmatprep.subr.bf16.mxu0 0
        %894 = vmatpush1.bf16.msra.mxu0 0
        %895 = vmatprep.subr.bf16.mxu0 0
        %896 = vmatpush1.bf16.msra.mxu0 0
        %897 = vmatprep.subr.bf16.mxu0 0
        %898 = vmatpush1.bf16.msra.mxu0 0
        %899 = vmatprep.subr.bf16.mxu0 0
        %900 = vmatpush1.bf16.msra.mxu0 0
        %901 = vmatprep.subr.bf16.mxu0 0
        %902 = vmatpush1.bf16.msra.mxu0 0
        %903 = vmatprep.subr.bf16.mxu0 0
        %904 = vmatpush1.bf16.msra.mxu0 0
        %905 = vmatprep.subr.bf16.mxu0 0
        %906 = vmatpush1.bf16.msra.mxu0 %v539
        %907 = vmatprep.subr.bf16.mxu0 0
        %908 = vmatpush1.bf16.msra.mxu0 %v538
        %909 = vmatprep.subr.bf16.mxu0 0
        %910 = vmatpush2.bf16.msra.mxu0 0
        %911 = vmatprep.subr.bf16.mxu0 0
        %912 = vmatpush2.bf16.msra.mxu0 0
        %913 = vmatprep.subr.bf16.mxu0 0
        %914 = vmatpush2.bf16.msra.mxu0 0
        %915 = vmatprep.subr.bf16.mxu0 0
        %916 = vmatpush2.bf16.msra.mxu0 0
        %917 = vmatprep.subr.bf16.mxu0 0
        %918 = vmatpush2.bf16.msra.mxu0 0
        %919 = vmatprep.subr.bf16.mxu0 0
        %920 = vmatpush2.bf16.msra.mxu0 0
        %921 = vmatprep.subr.bf16.mxu0 0
        %922 = vmatpush2.bf16.msra.mxu0 0
        %923 = vmatprep.subr.bf16.mxu0 0
        %924 = vmatpush2.bf16.msra.mxu0 0
        %925 = vmatprep.mubr.bf16.mxu0 0
        %926 = vmatmul.mubr.bf16.gmra.mxu0 %v891
        %v927 = vpop.f32.mrf.mxu0
        %v928 = vadd.f32 0.0, %v927
        %v929 = vpop.f32.mrf.mxu0
        %v930 = vpop.f32.mrf.mxu0
        %v931 = vpop.f32.mrf.mxu0
        %932 = vdwg.mxu0
        %v933 = vadd.f32 %v885, %v928
        %v934 = vxor.u32 %v933, 2147483648
        %v935 = vmul.f32 %v934, 1.442695
        %v936 = vpow.pop %v935
        %v937 = vadd.f32 %v936, 1.0
        %v938 = vrcp.pop %v937
        %v939 = vmul.f32 1.0, %v938
        %v940 = vtanh.pop %v933
        %v941 = vmul.f32 %v939, %v796
        %943 = vrot.lane.b32.xlu0 %v940, 64
        %v944 = vpop.permute.xlu0 %943
        %v946 = vmul.f32 %v939, %v944
        %948 = vrot.lane.b32.xlu0 %v946, 32
        %v949 = vpop.permute.xlu0 %948
        %v951 = vadd.f32 %v941, %v949
        %v952 = vtanh.pop %v951
        %954 = vrot.lane.b32.xlu0 %v952, 64
        %v955 = vpop.permute.xlu0 %954
        %v957 = vmul.f32 %v939, %v955
        %v958 = vstv %s882
        %vm959 = vcmp.lt.s32.totalorder %v958, %v410
        %v960 = vsel %vm959, 1, 0
        %961 = vset.pattern.permute.xlu0 0
        %962 = vperm.xlu0 %961, %v960
        %v963 = vpop.permute.xlu0 %962
        %vm964 = vcmp.eq.s32.totalorder %v963, 1
        %v965 = vsel %vm964, %v957, %v795
        %v966 = vsel %vm964, %v951, %v796
        %s967 = sadd.s32 %s411, 3
        %s968 = scalar_lea.vmem %s341, 12 [#allocation6]
        %v969 = vld [vmem:[%s968] sm:$0xf]
        %v970 = vunpack.c.l.bf16 %v969
        %v971 = vpack.c.bf16 %v880, %v880
        %973 = vrot.lane.b32.xlu0 %v971, 32
        %v974 = vpop.permute.xlu0 %973
        %v976 = vsel %vm435, %v974, 0
        %978 = vmatprep.subr.bf16.mxu0 0
        %979 = vmatpush1.bf16.msra.mxu0 0
        %980 = vmatprep.subr.bf16.mxu0 0
        %981 = vmatpush1.bf16.msra.mxu0 0
        %982 = vmatprep.subr.bf16.mxu0 0
        %983 = vmatpush1.bf16.msra.mxu0 0
        %984 = vmatprep.subr.bf16.mxu0 0
        %985 = vmatpush1.bf16.msra.mxu0 0
        %986 = vmatprep.subr.bf16.mxu0 0
        %987 = vmatpush1.bf16.msra.mxu0 0
        %988 = vmatprep.subr.bf16.mxu0 0
        %989 = vmatpush1.bf16.msra.mxu0 0
        %990 = vmatprep.subr.bf16.mxu0 0
        %991 = vmatpush1.bf16.msra.mxu0 %v432
        %992 = vmatprep.subr.bf16.mxu0 0
        %993 = vmatpush1.bf16.msra.mxu0 %v431
        %994 = vmatprep.subr.bf16.mxu0 0
        %995 = vmatpush2.bf16.msra.mxu0 0
        %996 = vmatprep.subr.bf16.mxu0 0
        %997 = vmatpush2.bf16.msra.mxu0 0
        %998 = vmatprep.subr.bf16.mxu0 0
        %999 = vmatpush2.bf16.msra.mxu0 0
        %1000 = vmatprep.subr.bf16.mxu0 0
        %1001 = vmatpush2.bf16.msra.mxu0 0
        %1002 = vmatprep.subr.bf16.mxu0 0
        %1003 = vmatpush2.bf16.msra.mxu0 0
        %1004 = vmatprep.subr.bf16.mxu0 0
        %1005 = vmatpush2.bf16.msra.mxu0 0
        %1006 = vmatprep.subr.bf16.mxu0 0
        %1007 = vmatpush2.bf16.msra.mxu0 0
        %1008 = vmatprep.subr.bf16.mxu0 0
        %1009 = vmatpush2.bf16.msra.mxu0 0
        %1010 = vmatprep.mubr.bf16.mxu0 0
        %1011 = vmatmul.mubr.bf16.gmra.mxu0 %v976
        %v1012 = vpop.f32.mrf.mxu0
        %v1013 = vadd.f32 0.0, %v1012
        %v1014 = vpop.f32.mrf.mxu0
        %v1015 = vpop.f32.mrf.mxu0
        %v1016 = vpop.f32.mrf.mxu0
        %1017 = vdwg.mxu0
        %v1018 = vadd.f32 %v970, %v1013
        %v1019 = vxor.u32 %v1018, 2147483648
        %v1020 = vmul.f32 %v1019, 1.442695
        %v1021 = vpow.pop %v1020
        %v1022 = vadd.f32 %v1021, 1.0
        %v1023 = vrcp.pop %v1022
        %v1024 = vmul.f32 1.0, %v1023
        %v1025 = vtanh.pop %v1018
        %v1026 = vmul.f32 %v1024, %v881
        %1028 = vrot.lane.b32.xlu0 %v1025, 64
        %v1029 = vpop.permute.xlu0 %1028
        %v1031 = vmul.f32 %v1024, %v1029
        %1033 = vrot.lane.b32.xlu0 %v1031, 32
        %v1034 = vpop.permute.xlu0 %1033
        %v1036 = vadd.f32 %v1026, %v1034
        %v1037 = vtanh.pop %v1036
        %1039 = vrot.lane.b32.xlu0 %v1037, 64
        %v1040 = vpop.permute.xlu0 %1039
        %v1042 = vmul.f32 %v1024, %v1040
        %v1043 = vstv %s967
        %vm1044 = vcmp.lt.s32.totalorder %v1043, %v410
        %v1045 = vsel %vm1044, 1, 0
        %1046 = vset.pattern.permute.xlu0 0
        %1047 = vperm.xlu0 %1046, %v1045
        %v1048 = vpop.permute.xlu0 %1047
        %vm1049 = vcmp.eq.s32.totalorder %v1048, 1
        %v1050 = vsel %vm1049, %v1042, %v880
        %v1051 = vsel %vm1049, %v1036, %v881
        %s1052 = ssub.s32 4, %s411
        %v1053 = vld [vmem:[%s350] sm:$0xf]
        %v1054 = vunpack.c.l.bf16 %v1053
        %v1055 = vpack.c.bf16 %v965, %v965
        %1057 = vrot.lane.b32.xlu0 %v1055, 32
        %v1058 = vpop.permute.xlu0 %1057
        %v1060 = vsel %vm435, %v1058, 0
        %1062 = vmatprep.subr.bf16.mxu0 0
        %1063 = vmatpush1.bf16.msra.mxu0 0
        %1064 = vmatprep.subr.bf16.mxu0 0
        %1065 = vmatpush1.bf16.msra.mxu0 0
        %1066 = vmatprep.subr.bf16.mxu0 0
        %1067 = vmatpush1.bf16.msra.mxu0 0
        %1068 = vmatprep.subr.bf16.mxu0 0
        %1069 = vmatpush1.bf16.msra.mxu0 0
        %1070 = vmatprep.subr.bf16.mxu0 0
        %1071 = vmatpush1.bf16.msra.mxu0 0
        %1072 = vmatprep.subr.bf16.mxu0 0
        %1073 = vmatpush1.bf16.msra.mxu0 0
        %1074 = vmatprep.subr.bf16.mxu0 0
        %1075 = vmatpush1.bf16.msra.mxu0 %v539
        %1076 = vmatprep.subr.bf16.mxu0 0
        %1077 = vmatpush1.bf16.msra.mxu0 %v538
        %1078 = vmatprep.subr.bf16.mxu0 0
        %1079 = vmatpush2.bf16.msra.mxu0 0
        %1080 = vmatprep.subr.bf16.mxu0 0
        %1081 = vmatpush2.bf16.msra.mxu0 0
        %1082 = vmatprep.subr.bf16.mxu0 0
        %1083 = vmatpush2.bf16.msra.mxu0 0
        %1084 = vmatprep.subr.bf16.mxu0 0
        %1085 = vmatpush2.bf16.msra.mxu0 0
        %1086 = vmatprep.subr.bf16.mxu0 0
        %1087 = vmatpush2.bf16.msra.mxu0 0
        %1088 = vmatprep.subr.bf16.mxu0 0
        %1089 = vmatpush2.bf16.msra.mxu0 0
        %1090 = vmatprep.subr.bf16.mxu0 0
        %1091 = vmatpush2.bf16.msra.mxu0 0
        %1092 = vmatprep.subr.bf16.mxu0 0
        %1093 = vmatpush2.bf16.msra.mxu0 0
        %1094 = vmatprep.mubr.bf16.mxu0 0
        %1095 = vmatmul.mubr.bf16.gmra.mxu0 %v1060
        %v1096 = vpop.f32.mrf.mxu0
        %v1097 = vadd.f32 0.0, %v1096
        %v1098 = vpop.f32.mrf.mxu0
        %v1099 = vpop.f32.mrf.mxu0
        %v1100 = vpop.f32.mrf.mxu0
        %1101 = vdwg.mxu0
        %v1102 = vadd.f32 %v1054, %v1097
        %v1103 = vxor.u32 %v1102, 2147483648
        %v1104 = vmul.f32 %v1103, 1.442695
        %v1105 = vpow.pop %v1104
        %v1106 = vadd.f32 %v1105, 1.0
        %v1107 = vrcp.pop %v1106
        %v1108 = vmul.f32 1.0, %v1107
        %v1109 = vtanh.pop %v1102
        %v1110 = vmul.f32 %v1108, %v966
        %1112 = vrot.lane.b32.xlu0 %v1109, 64
        %v1113 = vpop.permute.xlu0 %1112
        %v1115 = vmul.f32 %v1108, %v1113
        %1117 = vrot.lane.b32.xlu0 %v1115, 32
        %v1118 = vpop.permute.xlu0 %1117
        %v1120 = vadd.f32 %v1110, %v1118
        %v1121 = vtanh.pop %v1120
        %1123 = vrot.lane.b32.xlu0 %v1121, 64
        %v1124 = vpop.permute.xlu0 %1123
        %v1126 = vmul.f32 %v1108, %v1124
        %v1127 = vstv %s1052
        %vm1128 = vcmp.lt.s32.totalorder %v1127, %v410
        %v1129 = vsel %vm1128, 1, 0
        %1130 = vset.pattern.permute.xlu0 0
        %1131 = vperm.xlu0 %1130, %v1129
        %v1132 = vpop.permute.xlu0 %1131
        %vm1133 = vcmp.eq.s32.totalorder %v1132, 1
        %v1134 = vsel %vm1133, %v1126, %v965
        %v1135 = vsel %vm1133, %v1120, %v966
        %1137 = vrot.lane.b32.xlu0 %v1050, 32
        %v1138 = vpop.permute.xlu0 %1137
        %1140 = vst.msk [vmem:[#allocation2] sm:$0xff] %vm435, %v1138
        %1142 = vrot.lane.b32.xlu0 %v1051, 96
        %v1143 = vpop.permute.xlu0 %1142
        %1145 = vst.msk [vmem:[#allocation3] sm:$0xff] %vm435, %v1143
        %1147 = vrot.lane.b32.xlu0 %v1134, 32
        %v1148 = vpop.permute.xlu0 %1147
        %1150 = vst.msk [vmem:[#allocation4] sm:$0xff] %vm435, %v1148
        %1152 = vrot.lane.b32.xlu0 %v1135, 96
        %v1153 = vpop.permute.xlu0 %1152
        %1155 = vst.msk [vmem:[#allocation5] sm:$0xff] %vm435, %v1153
        %p1156 = scmp.eq.s32.totalorder %s31, 1
        // Predicated region
        $region69: #{tpu_custom_call.1} parent=47 // pred_check
          %p1157 = pneg %p1156
        $region70: #{tpu_custom_call.1} parent=47 // pred_check_branch
          %1159 = sbr.rel (%p1157) target = $region72
        $region71: #{tpu_custom_call.1} parent=47 // pred_region
          %v1160 = vld [vmem:[#allocation12] sm:$0xf]
          %v1161 = vld [vmem:[#allocation12 + $0x4] sm:$0xf]
          %v1162 = vld [vmem:[#allocation12 + $0x8] sm:$0xf]
          %v1163 = vld [vmem:[#allocation12 + $0xc] sm:$0xf]
          %v1164 = vld [vmem:[#allocation12 + $0x10] sm:$0xf]
          %v1165 = vld [vmem:[#allocation12 + $0x14] sm:$0xf]
          %v1166 = vld [vmem:[#allocation12 + $0x18] sm:$0xf]
          %v1167 = vld [vmem:[#allocation12 + $0x1c] sm:$0xf]
          %v1168 = vpack.c.bf16 %v1050, %v1050
          %v1169 = vpack.c.bf16 %v1134, %v1134
          %1171 = vrot.lane.b32.xlu0 %v1169, 32
          %v1172 = vpop.permute.xlu0 %1171
          %v1177 = vunpack.c.l.b16 %v1164
          %v1178 = vunpack.c.l.b16 %v1165
          %v1179 = vunpack.c.l.b16 %v1166
          %v1180 = vunpack.c.l.b16 %v1167
          %v1181 = vpack.c.b16 %v1178, %v1177
          %v1182 = vpack.c.b16 %v1180, %v1179
          %v1186 = vsel %vm435, %v1172, 0
          %1188 = vmatprep.subr.bf16.mxu0 0
          %1189 = vmatpush1.bf16.msra.mxu0 0
          %1190 = vmatprep.subr.bf16.mxu0 0
          %1191 = vmatpush1.bf16.msra.mxu0 0
          %1192 = vmatprep.subr.bf16.mxu0 0
          %1193 = vmatpush1.bf16.msra.mxu0 0
          %1194 = vmatprep.subr.bf16.mxu0 0
          %1195 = vmatpush1.bf16.msra.mxu0 0
          %1196 = vmatprep.subr.bf16.mxu0 0
          %1197 = vmatpush1.bf16.msra.mxu0 0
          %1198 = vmatprep.subr.bf16.mxu0 0
          %1199 = vmatpush1.bf16.msra.mxu0 0
          %1200 = vmatprep.subr.bf16.mxu0 0
          %1201 = vmatpush1.bf16.msra.mxu0 %v1182
          %1202 = vmatprep.subr.bf16.mxu0 0
          %1203 = vmatpush1.bf16.msra.mxu0 %v1181
          %1204 = vmatprep.subr.bf16.mxu0 0
          %1205 = vmatpush2.bf16.msra.mxu0 0
          %1206 = vmatprep.subr.bf16.mxu0 0
          %1207 = vmatpush2.bf16.msra.mxu0 0
          %1208 = vmatprep.subr.bf16.mxu0 0
          %1209 = vmatpush2.bf16.msra.mxu0 0
          %1210 = vmatprep.subr.bf16.mxu0 0
          %1211 = vmatpush2.bf16.msra.mxu0 0
          %1212 = vmatprep.subr.bf16.mxu0 0
          %1213 = vmatpush2.bf16.msra.mxu0 0
          %1214 = vmatprep.subr.bf16.mxu0 0
          %1215 = vmatpush2.bf16.msra.mxu0 0
          %1216 = vmatprep.subr.bf16.mxu0 0
          %1217 = vmatpush2.bf16.msra.mxu0 0
          %1218 = vmatprep.subr.bf16.mxu0 0
          %1219 = vmatpush2.bf16.msra.mxu0 0
          %1220 = vmatprep.mubr.bf16.mxu0 0
          %1221 = vmatmul.mubr.bf16.gmra.mxu0 %v1186
          %v1222 = vpop.f32.mrf.mxu0
          %v1223 = vadd.f32 0.0, %v1222
          %v1224 = vpop.f32.mrf.mxu0
          %v1225 = vpop.f32.mrf.mxu0
          %v1226 = vpop.f32.mrf.mxu0
          %1227 = vdwg.mxu0
          %1229 = vrot.lane.b32.xlu0 %v1168, 32
          %v1230 = vpop.permute.xlu0 %1229
          %v1235 = vunpack.c.l.b16 %v1160
          %v1236 = vunpack.c.l.b16 %v1161
          %v1237 = vunpack.c.l.b16 %v1162
          %v1238 = vunpack.c.l.b16 %v1163
          %v1239 = vpack.c.b16 %v1236, %v1235
          %v1240 = vpack.c.b16 %v1238, %v1237
          %v1244 = vsel %vm435, %v1230, 0
          %1246 = vmatprep.subr.bf16.mxu0 0
          %1247 = vmatpush1.bf16.msra.mxu0 0
          %1248 = vmatprep.subr.bf16.mxu0 0
          %1249 = vmatpush1.bf16.msra.mxu0 0
          %1250 = vmatprep.subr.bf16.mxu0 0
          %1251 = vmatpush1.bf16.msra.mxu0 0
          %1252 = vmatprep.subr.bf16.mxu0 0
          %1253 = vmatpush1.bf16.msra.mxu0 0
          %1254 = vmatprep.subr.bf16.mxu0 0
          %1255 = vmatpush1.bf16.msra.mxu0 0
          %1256 = vmatprep.subr.bf16.mxu0 0
          %1257 = vmatpush1.bf16.msra.mxu0 0
          %1258 = vmatprep.subr.bf16.mxu0 0
          %1259 = vmatpush1.bf16.msra.mxu0 %v1240
          %1260 = vmatprep.subr.bf16.mxu0 0
          %1261 = vmatpush1.bf16.msra.mxu0 %v1239
          %1262 = vmatprep.subr.bf16.mxu0 0
          %1263 = vmatpush2.bf16.msra.mxu0 0
          %1264 = vmatprep.subr.bf16.mxu0 0
          %1265 = vmatpush2.bf16.msra.mxu0 0
          %1266 = vmatprep.subr.bf16.mxu0 0
          %1267 = vmatpush2.bf16.msra.mxu0 0
          %1268 = vmatprep.subr.bf16.mxu0 0
          %1269 = vmatpush2.bf16.msra.mxu0 0
          %1270 = vmatprep.subr.bf16.mxu0 0
          %1271 = vmatpush2.bf16.msra.mxu0 0
          %1272 = vmatprep.subr.bf16.mxu0 0
          %1273 = vmatpush2.bf16.msra.mxu0 0
          %1274 = vmatprep.subr.bf16.mxu0 0
          %1275 = vmatpush2.bf16.msra.mxu0 0
          %1276 = vmatprep.subr.bf16.mxu0 0
          %1277 = vmatpush2.bf16.msra.mxu0 0
          %1278 = vmatprep.mubr.bf16.mxu0 0
          %1279 = vmatmul.mubr.bf16.gmra.mxu0 %v1244
          %v1280 = vpop.f32.mrf.mxu0
          %v1281 = vadd.f32 %v1223, %v1280
          %v1282 = vpop.f32.mrf.mxu0
          %v1283 = vpop.f32.mrf.mxu0
          %v1284 = vpop.f32.mrf.mxu0
          %1285 = vdwg.mxu0
          %v1286 = vld [vmem:[%s6] sm:$0x1]
          %v1288 = vlaneseq
          %v1289 = vshrl.u32 %v1288, 7
          %v1290 = vsub.s32 0, %v1289
          %v1291 = vrot.slane %v1286, %v1290
          %v1293 = vadd.f32 %v1281, %v1291
          %v1294 = vxor.u32 %v1293, 2147483648
          %v1295 = vmul.f32 %v1294, 1.442695
          %v1296 = vpow.pop %v1295
          %v1297 = vadd.f32 %v1296, 1.0
          %v1298 = vrcp.pop %v1297
          %v1299 = vmul.f32 1.0, %v1298
          %1300 = vst [vmem:[#allocation14] sm:$0xff] %v1299
        $region72: #{tpu_custom_call.1} parent=47 // pred_fallthru
          _
        // Predicated region
        $region73: #{tpu_custom_call.1} parent=47 // pred_check
          %p1301 = pneg %p224
        $region74: #{tpu_custom_call.1} parent=47 // pred_check_branch
          %1303 = sbr.rel (%p1301) target = $region76
        $region75: #{tpu_custom_call.1} parent=47 // pred_region
          %s1305 = ssub.s32 128, 128
          %1306 = vsyncadd [#allocation8], %s1305
          %s1307 = smul.addr %s30, 128
          %s1308 = scalar_lea.hbm %s7, %s1307
          %s1310 = sshll.u32 [#allocation14], 4
          %s1311 = int_to_ptr.vmem [resolvable:$true] %s1310
          %1313 = dma.vmem_to_hbm [thread:$0]  %s1311, 128, %s1308, [#allocation8]
        $region76: #{tpu_custom_call.1} parent=47 // pred_fallthru
          _
        // Predicated region
        $region77: #{tpu_custom_call.1} parent=47 // pred_check
          %p1314 = pneg %p224
        $region78: #{tpu_custom_call.1} parent=47 // pred_check_branch
          %1316 = sbr.rel (%p1314) target = $region80
        $region79: #{tpu_custom_call.1} parent=47 // pred_region
          %1317 = dma.done [#allocation8], 128
        $region80: #{tpu_custom_call.1} parent=47 // pred_fallthru
          _
      $region48: #{tpu_custom_call.1} parent=5 // pred_fallthru
        _
      %p1318 = scmp.le.s32.totalorder 2, %s21
      // Predicated region
      $region81: #{tpu_custom_call.1} parent=5 // pred_check
        %p1319 = pneg %p1318
      $region82: #{tpu_custom_call.1} parent=5 // pred_check_branch
        %1321 = sbr.rel (%p1319) target = $region84
      $region83: #{tpu_custom_call.1} parent=5 // pred_region
        %s1322 = ssub.s32 %s21, 2
      $region84: #{tpu_custom_call.1} parent=5 // pred_fallthru
        _
    $region6: #{tpu_custom_call.1} parent=1 // loop_footer
      %s25 = sadd.s32 1, %s21
    $region7: #{tpu_custom_call.1} parent=1 // loop_footer_branch
      %20 = sbr.rel target = $region3
    $region8: #{tpu_custom_call.1} parent=1 // loop_exit
      _
    %1323 = vsyncpa [#allocation7], 1
    %s1324 = scalar_lea.sflag [#allocation7], 1
    %1325 = vsyncpa %s1324, 1
    %1326 = vsyncpa [#allocation10], 1
    %s1327 = scalar_lea.sflag [#allocation10], 1
    %1328 = vsyncpa %s1327, 1
    %1329 = vsyncpa [#allocation13], 1
    %1330 = vsyncpa [#allocation8], 1
    %s1331 = scalar_lea.sflag [#allocation8], 1
    %1332 = vsyncpa %s1331, 1

</llo_original>
